<compile_context>
chip_gen: v7x
topology: tpu7x:2x2x1
jax: 0.10.0
libtpu: 0.0.40
codegen_flags: <defaults>
</compile_context>

<pallas_src>
import jax
import jax.numpy as jnp
from jax.experimental import pallas as pl
from jax.experimental.pallas import tpu as pltpu

IMG_EMB_DIM = 512   # hardcoded in ResNetWSL (img_emb_dim and the 512-wide replicate loop)
POOL = 8            # GAP = AvgPool2d(8), GMP = MaxPool2d(8)  ->  spatial must be 8x8


def resnet_wsl_kernel(x_ref, wall_ref, ball_ref, pmap_ref, bcls_ref,
                      sc_ref, fms_ref):
    """One batch tile of the WSL head.

    x_ref    : (Bt, F, HW)      backbone features, NCHW with HW flattened (matmul dtype)
    wall_ref : (F, CM + 3C)     fused RHS: [W_dc | W_dc@pmap | Wcls_a | Wcls_b]
    ball_ref : (1, CM + 3C)     fused bias: [b_dc | b_dc@pmap | 0 | 0]  (f32)
    pmap_ref : (CM, C)          class-wise avg-pool matrix (spatial_pooling), f32
    bcls_ref : (1, C)           classifier bias (f32)
    sc_ref   : (Bt, 2, C)       row 0 = softmax class scores, row 1 = softmax classifier
    fms_ref  : (Bt, C, HW)      feature_map_split, class-major
    """
    bt, f, hw = x_ref.shape
    cm, c = pmap_ref.shape

    # NCHW -> pixels-major with ONE batched XLU transpose (x stays in matmul
    # dtype; the (bt, hw) -> bt*hw merge is layout-preserving since hw % 8 == 0).
    x2 = jnp.swapaxes(x_ref[...], 1, 2).reshape(bt * hw, f)            # (bt*hw, F)

    # Single fused MXU pass over x, f32 accumulation.
    y = (jnp.dot(x2, wall_ref[...], preferred_element_type=jnp.float32)
         + ball_ref[...])                                               # (bt*hw, CM+3C)
    y3 = y.reshape(bt, hw, cm + 3 * c)

    ydc    = y3[..., :cm]                       # downconv maps            (bt, hw, CM)
    pooled = y3[..., cm:cm + c]                 # class-wise averaged maps (bt, hw, C)
    pa     = y3[..., cm + c:cm + 2 * c]         # x . Wcls[:512]           (bt, hw, C)
    pb     = y3[..., cm + 2 * c:]               # x . Wcls[512:]           (bt, hw, C)

    # GMP(8x8) over spatial, then class-wise average -> raw class scores.
    gmp = jnp.max(ydc, axis=1)                                          # (bt, CM)
    s_raw = jnp.dot(gmp, pmap_ref[...],
                    preferred_element_type=jnp.float32)                 # (bt, C)

    # feature_map_split = spatial_pooling(x_conv) * scores; stored class-major
    # with one full store (wrapper reshape back to NCHW is metadata-only).
    fm_split = pooled * s_raw[:, None, :]                               # (bt, hw, C)
    fms_ref[...] = jnp.swapaxes(fm_split, 1, 2)                         # (bt, C, hw)

    # spatial_pooling2: mean over the C class maps.
    fm = jnp.mean(fm_split, axis=2)                                     # (bt, hw)

    # Classifier on cat(GAP(x_ori), GAP(x_ori * fm)):
    # both halves were folded into the big matmul (pa / pb columns), so only a
    # tiny (bt, hw, C) product + spatial means remain here.
    logits = ((jnp.sum(pa, axis=1)
               + jnp.sum(pb * fm[:, :, None], axis=1)) * (1.0 / hw)
              + bcls_ref[...])                                          # (bt, C)

    both = jnp.concatenate([s_raw[:, None, :], logits[:, None, :]], axis=1)  # (bt,2,C)
    m = jnp.max(both, axis=-1, keepdims=True)
    e = jnp.exp(both - m)
    sc_ref[...] = e / jnp.sum(e, axis=-1, keepdims=True)


def init_params(key, num_classes, num_maps):
    k1, k2, k3, k4 = jax.random.split(key, 4)
    CM = num_classes * num_maps
    # Conv2d(512, C*M, 1): weight (CM, 512, 1, 1) stored transposed as (512, CM)
    w_dc = 0.02 * jax.random.normal(k1, (IMG_EMB_DIM, CM), jnp.float32)
    b_dc = 0.02 * jax.random.normal(k2, (1, CM), jnp.float32)
    # Linear(1024, C): weight (C, 1024) stored transposed as (1024, C)
    w_cls = 0.02 * jax.random.normal(k3, (2 * IMG_EMB_DIM, num_classes), jnp.float32)
    b_cls = 0.02 * jax.random.normal(k4, (1, num_classes), jnp.float32)
    # ClassWisePool matrices (channel c*M + m belongs to class c)
    cm_idx = jnp.arange(CM)
    pmap = (jnp.equal(cm_idx[:, None] // num_maps,
                      jnp.arange(num_classes)[None, :])
            .astype(jnp.float32) / num_maps)                  # (CM, C)
    pmap2 = jnp.full((num_classes, 1), 1.0 / num_classes, jnp.float32)
    return dict(w_dc=w_dc, b_dc=b_dc, pmap=pmap, pmap2=pmap2,
                w_cls=w_cls, b_cls=b_cls)


def _prep_weights(params, matmul_dtype):
    hi = jax.lax.Precision.HIGHEST
    w_dc, b_dc, pmap = params["w_dc"], params["b_dc"], params["pmap"]
    w_cls, b_cls = params["w_cls"], params["b_cls"]
    F = w_dc.shape[0]
    C = pmap.shape[1]
    # Fold the (linear) ClassWisePool into the downconv for the pooled path.
    w_pool = jnp.dot(w_dc, pmap, precision=hi)                # (F, C)
    b_pool = jnp.dot(b_dc, pmap, precision=hi)                # (1, C)
    wcls_a = w_cls[:F]                                        # x_ori GAP half
    wcls_b = w_cls[F:]                                        # (x_ori * fm) GAP half
    w_all = jnp.concatenate([w_dc, w_pool, wcls_a, wcls_b],
                            axis=1).astype(matmul_dtype)      # (F, CM+3C)
    b_all = jnp.concatenate([b_dc, b_pool,
                             jnp.zeros((1, 2 * C), jnp.float32)], axis=1)  # (1, CM+3C)
    return w_all, b_all, pmap, b_cls


def resnet_wsl_forward(x_nchw, params, num_classes, *,
                       block_b=64, matmul_dtype=jnp.bfloat16):
    """x_nchw: backbone features, PyTorch layout (B, 512, 8, 8)."""
    B, F, H, W = x_nchw.shape
    assert F == IMG_EMB_DIM and H == POOL and W == POOL
    HW = H * W
    C = num_classes

    # Batch tile: large enough to amortize per-step overhead, but split small
    # batches into >=2 grid steps so both v7x TensorCores get work.
    bt = max(1, int(block_b))
    if B <= bt:
        bt = max(1, (B + 1) // 2)
    n_blk = pl.cdiv(B, bt)
    b_pad = n_blk * bt

    # Channels stay major (metadata-only reshape); x is DMA'd in the matmul
    # dtype (bf16 default) to halve HBM traffic of the dominant input.
    x = x_nchw.reshape(B, F, HW).astype(matmul_dtype)
    if b_pad != B:
        x = jnp.pad(x, ((0, b_pad - B), (0, 0), (0, 0)))

    consts = _prep_weights(params, matmul_dtype)   # (w_all, b_all, pmap, b_cls)

    def _tile_spec(shape):
        nd = len(shape)
        return pl.BlockSpec(shape, lambda i, _nd=nd: (i,) + (0,) * (_nd - 1))

    def _const_spec(arr):
        nd = arr.ndim
        return pl.BlockSpec(arr.shape, lambda i, _nd=nd: (0,) * _nd)

    sc, fms = pl.pallas_call(
        resnet_wsl_kernel,
        grid=(n_blk,),
        in_specs=[_tile_spec((bt, F, HW))] + [_const_spec(a) for a in consts],
        out_specs=(
            _tile_spec((bt, 2, C)),
            _tile_spec((bt, C, HW)),
        ),
        out_shape=(
            jax.ShapeDtypeStruct((b_pad, 2, C), jnp.float32),
            jax.ShapeDtypeStruct((b_pad, C, HW), jnp.float32),
        ),
        compiler_params=pltpu.CompilerParams(
            dimension_semantics=("parallel",),
            vmem_limit_bytes=48 * 1024 * 1024,
        ),
    )(x, *consts)

    s = sc[:B, 0, :]
    cls = sc[:B, 1, :]
    fms_nchw = fms[:B].reshape(B, C, H, W)   # already class-major; reshape only
    return s, cls, fms_nchw


def reference_forward(x_nchw, params, num_classes):
    """Plain-JAX mirror of the PyTorch forward (for a correctness check)."""
    B, F, H, W = x_nchw.shape
    HW = H * W
    x = jnp.transpose(x_nchw, (0, 2, 3, 1)).reshape(B, HW, F).astype(jnp.float32)
    y = x.reshape(B * HW, F) @ params["w_dc"] + params["b_dc"]
    y3 = y.reshape(B, HW, -1)
    s_raw = jnp.max(y3, axis=1) @ params["pmap"]
    pooled = (y @ params["pmap"]).reshape(B, HW, num_classes)
    fm_split = pooled * s_raw[:, None, :]
    fm = (fm_split.reshape(B * HW, num_classes) @ params["pmap2"]).reshape(B, HW)
    prod = x * fm[:, :, None]
    gap = jnp.concatenate([jnp.mean(x, axis=1), jnp.mean(prod, axis=1)], axis=-1)
    logits = gap @ params["w_cls"] + params["b_cls"]
    fms_nchw = jnp.transpose(fm_split.reshape(B, H, W, num_classes), (0, 3, 1, 2))
    return (jax.nn.softmax(s_raw, axis=-1),
            jax.nn.softmax(logits, axis=-1),
            fms_nchw)


if __name__ == "__main__":
    num_classes, num_maps, batch = 8, 4, 6
    key = jax.random.PRNGKey(0)
    kx, kp = jax.random.split(key)

    # Backbone feature map (output of `self.features`): (B, 512, 8, 8)
    x = jax.random.normal(kx, (batch, IMG_EMB_DIM, POOL, POOL), jnp.float32)
    params = init_params(kp, num_classes, num_maps)

    refs = reference_forward(x, params, num_classes)

    # Exact path: f32 MXU inputs; block_b=4 -> 2 grid steps and exercises padding.
    outs_f32 = resnet_wsl_forward(x, params, num_classes,
                                  block_b=4, matmul_dtype=jnp.float32)
    outs_f32 = jax.block_until_ready(outs_f32)
    for o, r in zip(outs_f32, refs):
        assert o.shape == r.shape and o.dtype == r.dtype
        assert jnp.allclose(o, r, rtol=2e-3, atol=2e-3), "f32 kernel mismatch vs reference"

    # Default (performance) path: bf16 x/weight DMA, f32 accumulation.
    outs_bf16 = resnet_wsl_forward(x, params, num_classes)
    outs_bf16 = jax.block_until_ready(outs_bf16)
    for o, r in zip(outs_bf16, refs):
        assert o.shape == r.shape and o.dtype == r.dtype
        assert jnp.allclose(o, r, rtol=5e-2, atol=1e-2), "bf16 kernel mismatch vs reference"

    print("KERNEL_OK")
</pallas_src>

<mosaic_0001>
module attributes {stable_mosaic.version = 11 : i64} {
  func.func @resnet_wsl_kernel(%arg0: i32, %arg1: memref<4x512x64xf32, #tpu.memory_space<vmem>>, %arg2: memref<512x56xf32, #tpu.memory_space<vmem>>, %arg3: memref<1x56xf32, #tpu.memory_space<vmem>>, %arg4: memref<32x8xf32, #tpu.memory_space<vmem>>, %arg5: memref<1x8xf32, #tpu.memory_space<vmem>>, %arg6: memref<4x2x8xf32, #tpu.memory_space<vmem>>, %arg7: memref<4x8x64xf32, #tpu.memory_space<vmem>>) attributes {dimension_semantics = [#tpu.dimension_semantics<parallel>], iteration_bounds = array<i64: 2>, scalar_prefetch = 0 : i64, scratch_operands = 0 : i64, tpu.core_type = #tpu.core_type<tc>, window_params = [{transform_indices = @transform_0, window_bounds = array<i64: 4, 512, 64>}, {pipeline_mode = #tpu.pipeline_mode<synchronous>, transform_indices = @transform_1, window_bounds = array<i64: 512, 56>}, {pipeline_mode = #tpu.pipeline_mode<synchronous>, transform_indices = @transform_2, window_bounds = array<i64: 1, 56>}, {pipeline_mode = #tpu.pipeline_mode<synchronous>, transform_indices = @transform_3, window_bounds = array<i64: 32, 8>}, {pipeline_mode = #tpu.pipeline_mode<synchronous>, transform_indices = @transform_4, window_bounds = array<i64: 1, 8>}, {transform_indices = @transform_5, window_bounds = array<i64: 4, 2, 8>}, {transform_indices = @transform_6, window_bounds = array<i64: 4, 8, 64>}]} {
    %c0 = arith.constant 0 : index
    %c0_0 = arith.constant 0 : index
    %c0_1 = arith.constant 0 : index
    %0 = vector.load %arg1[%c0, %c0_0, %c0_1] : memref<4x512x64xf32, #tpu.memory_space<vmem>>, vector<4x512x64xf32>
    %1 = tpu.transpose %0, [0, 2, 1] : vector<4x512x64xf32> -> vector<4x64x512xf32>
    %2 = vector.shape_cast %1 : vector<4x64x512xf32> to vector<256x512xf32>
    %c0_2 = arith.constant 0 : index
    %c0_3 = arith.constant 0 : index
    %3 = vector.load %arg2[%c0_2, %c0_3] : memref<512x56xf32, #tpu.memory_space<vmem>>, vector<512x56xf32>
    %cst = arith.constant dense<0.000000e+00> : vector<256x56xf32>
    %4 = tpu.matmul %2, %3, %cst {dimension_numbers = #tpu.dot_dimension_numbers<[1], [0], [0], [1], [0, 0, 1, 1], [], []>} : vector<256x512xf32>, vector<512x56xf32>, vector<256x56xf32> -> vector<256x56xf32>
    %c0_4 = arith.constant 0 : index
    %c0_5 = arith.constant 0 : index
    %5 = vector.load %arg3[%c0_4, %c0_5] : memref<1x56xf32, #tpu.memory_space<vmem>>, vector<1x56xf32>
    %6 = vector.broadcast %5 : vector<1x56xf32> to vector<256x56xf32>
    %7 = arith.addf %4, %6 : vector<256x56xf32>
    %8 = vector.shape_cast %7 : vector<256x56xf32> to vector<4x64x56xf32>
    %9 = vector.extract_strided_slice %8 {offsets = [0, 0, 0], sizes = [4, 64, 32], strides = [1, 1, 1]} : vector<4x64x56xf32> to vector<4x64x32xf32>
    %10 = vector.extract_strided_slice %8 {offsets = [0, 0, 32], sizes = [4, 64, 8], strides = [1, 1, 1]} : vector<4x64x56xf32> to vector<4x64x8xf32>
    %11 = vector.extract_strided_slice %8 {offsets = [0, 0, 40], sizes = [4, 64, 8], strides = [1, 1, 1]} : vector<4x64x56xf32> to vector<4x64x8xf32>
    %12 = vector.extract_strided_slice %8 {offsets = [0, 0, 48], sizes = [4, 64, 8], strides = [1, 1, 1]} : vector<4x64x56xf32> to vector<4x64x8xf32>
    %cst_6 = arith.constant dense<0xFF800000> : vector<4x32xf32>
    %13 = vector.multi_reduction <maximumf>, %9, %cst_6 [1] : vector<4x64x32xf32> to vector<4x32xf32>
    %c0_7 = arith.constant 0 : index
    %c0_8 = arith.constant 0 : index
    %14 = vector.load %arg4[%c0_7, %c0_8] : memref<32x8xf32, #tpu.memory_space<vmem>>, vector<32x8xf32>
    %cst_9 = arith.constant dense<0.000000e+00> : vector<4x8xf32>
    %15 = tpu.matmul %13, %14, %cst_9 {dimension_numbers = #tpu.dot_dimension_numbers<[1], [0], [0], [1], [0, 0, 1, 1], [], []>} : vector<4x32xf32>, vector<32x8xf32>, vector<4x8xf32> -> vector<4x8xf32>
    %16 = vector.shape_cast %15 : vector<4x8xf32> to vector<4x1x8xf32>
    %17 = vector.broadcast %16 : vector<4x1x8xf32> to vector<4x64x8xf32>
    %18 = arith.mulf %10, %17 : vector<4x64x8xf32>
    %19 = tpu.transpose %18, [0, 2, 1] : vector<4x64x8xf32> -> vector<4x8x64xf32>
    %c0_10 = arith.constant 0 : index
    %c0_11 = arith.constant 0 : index
    %c0_12 = arith.constant 0 : index
    %20 = vector.load %arg7[%c0_10, %c0_11, %c0_12] : memref<4x8x64xf32, #tpu.memory_space<vmem>>, vector<4x8x64xf32>
    tpu.vector_store %arg7[%c0_10, %c0_11, %c0_12], %19 {strides = array<i32>} : memref<4x8x64xf32, #tpu.memory_space<vmem>>, vector<4x8x64xf32>,
    %cst_13 = arith.constant dense<0.000000e+00> : vector<4x64xf32>
    %21 = vector.multi_reduction <add>, %18, %cst_13 [2] : vector<4x64x8xf32> to vector<4x64xf32>
    %cst_14 = arith.constant 8.000000e+00 : f32
    %22 = vector.broadcast %cst_14 : f32 to vector<4x64xf32>
    %23 = arith.divf %21, %22 : vector<4x64xf32>
    %cst_15 = arith.constant dense<0.000000e+00> : vector<4x8xf32>
    %24 = vector.multi_reduction <add>, %11, %cst_15 [1] : vector<4x64x8xf32> to vector<4x8xf32>
    %25 = vector.shape_cast %23 : vector<4x64xf32> to vector<4x64x1xf32>
    %26 = vector.broadcast %25 : vector<4x64x1xf32> to vector<4x64x8xf32>
    %27 = arith.mulf %12, %26 : vector<4x64x8xf32>
    %cst_16 = arith.constant dense<0.000000e+00> : vector<4x8xf32>
    %28 = vector.multi_reduction <add>, %27, %cst_16 [1] : vector<4x64x8xf32> to vector<4x8xf32>
    %29 = arith.addf %24, %28 : vector<4x8xf32>
    %cst_17 = arith.constant 1.562500e-02 : f32
    %30 = vector.broadcast %cst_17 : f32 to vector<4x8xf32>
    %31 = arith.mulf %29, %30 : vector<4x8xf32>
    %c0_18 = arith.constant 0 : index
    %c0_19 = arith.constant 0 : index
    %32 = vector.load %arg5[%c0_18, %c0_19] : memref<1x8xf32, #tpu.memory_space<vmem>>, vector<1x8xf32>
    %33 = vector.broadcast %32 : vector<1x8xf32> to vector<4x8xf32>
    %34 = arith.addf %31, %33 : vector<4x8xf32>
    %35 = vector.shape_cast %15 : vector<4x8xf32> to vector<4x1x8xf32>
    %36 = vector.shape_cast %34 : vector<4x8xf32> to vector<4x1x8xf32>
    %37 = tpu.concatenate %35, %36 in 1 : vector<4x1x8xf32>, vector<4x1x8xf32> -> vector<4x2x8xf32>
    %cst_20 = arith.constant dense<0xFF800000> : vector<4x2xf32>
    %38 = vector.multi_reduction <maximumf>, %37, %cst_20 [2] : vector<4x2x8xf32> to vector<4x2xf32>
    %39 = vector.shape_cast %38 : vector<4x2xf32> to vector<4x2x1xf32>
    %40 = vector.broadcast %39 : vector<4x2x1xf32> to vector<4x2x8xf32>
    %41 = arith.subf %37, %40 : vector<4x2x8xf32>
    %42 = math.exp %41 : vector<4x2x8xf32>
    %cst_21 = arith.constant dense<0.000000e+00> : vector<4x2xf32>
    %43 = vector.multi_reduction <add>, %42, %cst_21 [2] : vector<4x2x8xf32> to vector<4x2xf32>
    %44 = vector.shape_cast %43 : vector<4x2xf32> to vector<4x2x1xf32>
    %45 = vector.broadcast %44 : vector<4x2x1xf32> to vector<4x2x8xf32>
    %46 = arith.divf %42, %45 : vector<4x2x8xf32>
    %c0_22 = arith.constant 0 : index
    %c0_23 = arith.constant 0 : index
    %c0_24 = arith.constant 0 : index
    %47 = vector.load %arg6[%c0_22, %c0_23, %c0_24] : memref<4x2x8xf32, #tpu.memory_space<vmem>>, vector<4x2x8xf32>
    tpu.vector_store %arg6[%c0_22, %c0_23, %c0_24], %46 {strides = array<i32>} : memref<4x2x8xf32, #tpu.memory_space<vmem>>, vector<4x2x8xf32>,
    return
  }
  func.func @transform_0(%arg0: i32) -> (i32, i32, i32) {
    %c0_i32 = arith.constant 0 : i32
    %c0_i32_0 = arith.constant 0 : i32
    %c0_i32_1 = arith.constant 0 : i32
    return %arg0, %c0_i32, %c0_i32_0 : i32, i32, i32
  }
  func.func @transform_1(%arg0: i32) -> (i32, i32) {
    %c0_i32 = arith.constant 0 : i32
    %c0_i32_0 = arith.constant 0 : i32
    %c0_i32_1 = arith.constant 0 : i32
    return %c0_i32, %c0_i32_0 : i32, i32
  }
  func.func @transform_2(%arg0: i32) -> (i32, i32) {
    %c0_i32 = arith.constant 0 : i32
    %c0_i32_0 = arith.constant 0 : i32
    %c0_i32_1 = arith.constant 0 : i32
    return %c0_i32, %c0_i32_0 : i32, i32
  }
  func.func @transform_3(%arg0: i32) -> (i32, i32) {
    %c0_i32 = arith.constant 0 : i32
    %c0_i32_0 = arith.constant 0 : i32
    %c0_i32_1 = arith.constant 0 : i32
    return %c0_i32, %c0_i32_0 : i32, i32
  }
  func.func @transform_4(%arg0: i32) -> (i32, i32) {
    %c0_i32 = arith.constant 0 : i32
    %c0_i32_0 = arith.constant 0 : i32
    %c0_i32_1 = arith.constant 0 : i32
    return %c0_i32, %c0_i32_0 : i32, i32
  }
  func.func @transform_5(%arg0: i32) -> (i32, i32, i32) {
    %c0_i32 = arith.constant 0 : i32
    %c0_i32_0 = arith.constant 0 : i32
    %c0_i32_1 = arith.constant 0 : i32
    return %arg0, %c0_i32, %c0_i32_0 : i32, i32, i32
  }
  func.func @transform_6(%arg0: i32) -> (i32, i32, i32) {
    %c0_i32 = arith.constant 0 : i32
    %c0_i32_0 = arith.constant 0 : i32
    %c0_i32_1 = arith.constant 0 : i32
    return %arg0, %c0_i32, %c0_i32_0 : i32, i32, i32
  }
}

</mosaic_0001>

<llo_original>
// kernel: tpu_custom_call.1
$region0: #{tpu_custom_call.1}
  #allocation0 [shape = 'u32[]', space=smem, size = 0x4, offset = 0x4, fixed_abs, tag = 'smem constant byte address 0x4 - core index']
  #allocation1 [shape = 'u32[144,128]{1,0:T(1,128)}', space=vmem, size = 0x12000, scoped, tag = 'internal scratch']
  %s0 = inlined_call_operand.vmem [shape: f32[8,512,64], index: 0, kind: input, shape index: {}]
  %s1 = inlined_call_operand.vmem [shape: f32[512,56], index: 1, kind: input, shape index: {}]
  %s2 = inlined_call_operand.vmem [shape: f32[1,56], index: 2, kind: input, shape index: {}]
  %s3 = inlined_call_operand.vmem [shape: f32[32,8], index: 3, kind: input, shape index: {}]
  %s4 = inlined_call_operand.vmem [shape: f32[1,8], index: 4, kind: input, shape index: {}]
  %s5 = inlined_call_operand.hbm [shape: f32[8,2,8], index: 5, kind: output, shape index: {0}]
  %s6 = inlined_call_operand.hbm [shape: f32[8,8,64], index: 6, kind: output, shape index: {1}]
  %7 = xla_tuple %s5, %s6
  %s8 = sld [smem:[#allocation0]]
  $region61: #{tpu_custom_call.1} parent=0
    _
  %s10 = ssub.s32 1, %s8
  %s11 = scalar_select 0, %s10, %s8
  $region1: #{tpu_custom_call.1} parent=0
    #allocation2 [shape = 'u8[8192]{0}', space=vmem, size = 0x2000, scoped, tag = 'output window, operand 0']
    #allocation3 [shape = 's32[2]{0}', space=sflag, size = 0x8, scoped, tag = 'scoped memory for tpu_custom_call.1']
    #allocation4 [shape = 'u8[32768]{0}', space=vmem, size = 0x8000, scoped, tag = 'output window, operand 1']
    #allocation5 [shape = 's32[2]{0}', space=sflag, size = 0x8, scoped, tag = 'scoped memory for tpu_custom_call.1']
    %12 = vsyncpa [#allocation3], 0
    %s13 = scalar_lea.sflag [#allocation3], 1
    %14 = vsyncpa %s13, 0
    %15 = vsyncpa [#allocation5], 0
    %s16 = scalar_lea.sflag [#allocation5], 1
    %17 = vsyncpa %s16, 0
    loop: start=0, step=1, limit=4
    $region2: #{tpu_custom_call.1} parent=1 // loop_pre_header
      _
    $region3: #{tpu_custom_call.1} parent=1 // loop_header
      %s19 = sphi 0, %s23
      %p20 = scmp.ge.s32.totalorder %s19, 4
      %s29 = sphi 0, %s31
      %s32 = sphi 0, %s29
      %s33 = sphi 0, %s32
      %s49 = sphi 0, %s33
      %s53 = sphi 0, %s53
      %s55 = sphi 0, %s53
      %s56 = sphi 0, %s55
      %s70 = sphi 0, %s56
      %s74 = sphi 0, %s74
      %s76 = sphi 0, %s74
      %s77 = sphi 0, %s76
      %s91 = sphi 0, %s77
      %s95 = sphi 0, %s95
      %s97 = sphi 0, %s95
      %s98 = sphi 0, %s97
      %s112 = sphi 0, %s98
      %s116 = sphi 0, %s116
      %s118 = sphi 0, %s116
      %s119 = sphi 0, %s118
      %s133 = sphi 0, %s119
      %s139 = sphi 0, %s141
      %s142 = sphi 0, %s139
      %s143 = sphi 0, %s142
      %s159 = sphi 0, %s143
      %s165 = sphi 0, %s167
      %s168 = sphi 0, %s165
      %s169 = sphi 0, %s168
      %s185 = sphi 0, %s169
    $region4: #{tpu_custom_call.1} parent=1 // loop_header_branch
      %22 = sbr.rel (%p20) target = $region8
    $region5: #{tpu_custom_call.1} parent=1 // loop_body
      %s24 = ssub.s32 %s19, 1
      %s25 = ssub.s32 %s19, 2
      %s26 = sadd.s32 %s19, 1
      %s27 = ssub.s32 %s19, %s26
      %p28 = scmp.eq.s32.totalorder %s27, 0
      %s30 = sadd.s32 %s29, 1
      %s31 = scalar_select %p28, %s29, %s30
      %p34 = pneg %p28
      %p35 = scmp.eq.s32.totalorder %s19, 1
      %p36 = por %p34, %p35
      %p37 = scmp.ne.s32.totalorder %s29, %s32
      %p38 = scmp.eq.s32.totalorder %s19, 0
      %p39 = por %p37, %p38
      %p40 = scmp.ne.s32.totalorder %s29, %s32
      %p41 = scmp.eq.s32.totalorder %s24, 1
      %p42 = por %p40, %p41
      %p43 = scmp.ne.s32.totalorder %s32, %s33
      %p44 = scmp.eq.s32.totalorder %s24, 0
      %p45 = por %p43, %p44
      %p46 = scmp.ne.s32.totalorder %s32, %s33
      %p47 = scmp.eq.s32.totalorder %s25, 1
      %p48 = por %p46, %p47
      %p50 = scmp.ne.s32.totalorder %s33, %s49
      %p51 = scmp.eq.s32.totalorder %s25, 0
      %p52 = por %p50, %p51
      %s54 = sadd.s32 %s53, 1
      %p57 = scmp.eq.s32.totalorder %s19, 1
      %p58 = scmp.ne.s32.totalorder %s53, %s55
      %p59 = scmp.eq.s32.totalorder %s19, 0
      %p60 = por %p58, %p59
      %p61 = scmp.ne.s32.totalorder %s53, %s55
      %p62 = scmp.eq.s32.totalorder %s24, 1
      %p63 = por %p61, %p62
      %p64 = scmp.ne.s32.totalorder %s55, %s56
      %p65 = scmp.eq.s32.totalorder %s24, 0
      %p66 = por %p64, %p65
      %p67 = scmp.ne.s32.totalorder %s55, %s56
      %p68 = scmp.eq.s32.totalorder %s25, 1
      %p69 = por %p67, %p68
      %p71 = scmp.ne.s32.totalorder %s56, %s70
      %p72 = scmp.eq.s32.totalorder %s25, 0
      %p73 = por %p71, %p72
      %s75 = sadd.s32 %s74, 1
      %p78 = scmp.eq.s32.totalorder %s19, 1
      %p79 = scmp.ne.s32.totalorder %s74, %s76
      %p80 = scmp.eq.s32.totalorder %s19, 0
      %p81 = por %p79, %p80
      %p82 = scmp.ne.s32.totalorder %s74, %s76
      %p83 = scmp.eq.s32.totalorder %s24, 1
      %p84 = por %p82, %p83
      %p85 = scmp.ne.s32.totalorder %s76, %s77
      %p86 = scmp.eq.s32.totalorder %s24, 0
      %p87 = por %p85, %p86
      %p88 = scmp.ne.s32.totalorder %s76, %s77
      %p89 = scmp.eq.s32.totalorder %s25, 1
      %p90 = por %p88, %p89
      %p92 = scmp.ne.s32.totalorder %s77, %s91
      %p93 = scmp.eq.s32.totalorder %s25, 0
      %p94 = por %p92, %p93
      %s96 = sadd.s32 %s95, 1
      %p99 = scmp.eq.s32.totalorder %s19, 1
      %p100 = scmp.ne.s32.totalorder %s95, %s97
      %p101 = scmp.eq.s32.totalorder %s19, 0
      %p102 = por %p100, %p101
      %p103 = scmp.ne.s32.totalorder %s95, %s97
      %p104 = scmp.eq.s32.totalorder %s24, 1
      %p105 = por %p103, %p104
      %p106 = scmp.ne.s32.totalorder %s97, %s98
      %p107 = scmp.eq.s32.totalorder %s24, 0
      %p108 = por %p106, %p107
      %p109 = scmp.ne.s32.totalorder %s97, %s98
      %p110 = scmp.eq.s32.totalorder %s25, 1
      %p111 = por %p109, %p110
      %p113 = scmp.ne.s32.totalorder %s98, %s112
      %p114 = scmp.eq.s32.totalorder %s25, 0
      %p115 = por %p113, %p114
      %s117 = sadd.s32 %s116, 1
      %p120 = scmp.eq.s32.totalorder %s19, 1
      %p121 = scmp.ne.s32.totalorder %s116, %s118
      %p122 = scmp.eq.s32.totalorder %s19, 0
      %p123 = por %p121, %p122
      %p124 = scmp.ne.s32.totalorder %s116, %s118
      %p125 = scmp.eq.s32.totalorder %s24, 1
      %p126 = por %p124, %p125
      %p127 = scmp.ne.s32.totalorder %s118, %s119
      %p128 = scmp.eq.s32.totalorder %s24, 0
      %p129 = por %p127, %p128
      %p130 = scmp.ne.s32.totalorder %s118, %s119
      %p131 = scmp.eq.s32.totalorder %s25, 1
      %p132 = por %p130, %p131
      %p134 = scmp.ne.s32.totalorder %s119, %s133
      %p135 = scmp.eq.s32.totalorder %s25, 0
      %p136 = por %p134, %p135
      %s137 = ssub.s32 %s19, %s26
      %p138 = scmp.eq.s32.totalorder %s137, 0
      %s140 = sadd.s32 %s139, 1
      %s141 = scalar_select %p138, %s139, %s140
      %p144 = pneg %p138
      %p145 = scmp.eq.s32.totalorder %s19, 1
      %p146 = por %p144, %p145
      %p147 = scmp.ne.s32.totalorder %s139, %s142
      %p148 = scmp.eq.s32.totalorder %s19, 0
      %p149 = por %p147, %p148
      %p150 = scmp.ne.s32.totalorder %s139, %s142
      %p151 = scmp.eq.s32.totalorder %s24, 1
      %p152 = por %p150, %p151
      %p153 = scmp.ne.s32.totalorder %s142, %s143
      %p154 = scmp.eq.s32.totalorder %s24, 0
      %p155 = por %p153, %p154
      %p156 = scmp.ne.s32.totalorder %s142, %s143
      %p157 = scmp.eq.s32.totalorder %s25, 1
      %p158 = por %p156, %p157
      %p160 = scmp.ne.s32.totalorder %s143, %s159
      %p161 = scmp.eq.s32.totalorder %s25, 0
      %p162 = por %p160, %p161
      %s163 = ssub.s32 %s19, %s26
      %p164 = scmp.eq.s32.totalorder %s163, 0
      %s166 = sadd.s32 %s165, 1
      %s167 = scalar_select %p164, %s165, %s166
      %p170 = pneg %p164
      %p171 = scmp.eq.s32.totalorder %s19, 1
      %p172 = por %p170, %p171
      %p173 = scmp.ne.s32.totalorder %s165, %s168
      %p174 = scmp.eq.s32.totalorder %s19, 0
      %p175 = por %p173, %p174
      %p176 = scmp.ne.s32.totalorder %s165, %s168
      %p177 = scmp.eq.s32.totalorder %s24, 1
      %p178 = por %p176, %p177
      %p179 = scmp.ne.s32.totalorder %s168, %s169
      %p180 = scmp.eq.s32.totalorder %s24, 0
      %p181 = por %p179, %p180
      %p182 = scmp.ne.s32.totalorder %s168, %s169
      %p183 = scmp.eq.s32.totalorder %s25, 1
      %p184 = por %p182, %p183
      %p186 = scmp.ne.s32.totalorder %s169, %s185
      %p187 = scmp.eq.s32.totalorder %s25, 0
      %p188 = por %p186, %p187
      %p189 = scmp.le.s32.totalorder 1, %s19
      %p190 = scmp.lt.s32.totalorder %s19, 3
      %p191 = pnand %p189, %p190
      %p192 = pneg %p191
      // Predicated region
      $region9: #{tpu_custom_call.1} parent=5 // pred_check
        _
      $region10: #{tpu_custom_call.1} parent=5 // pred_check_branch
        %194 = sbr.rel (%p191) target = $region12
      $region11: #{tpu_custom_call.1} parent=5 // pred_region
        %s195 = ssub.s32 %s19, 1
        // Predicated region
        $region13: #{tpu_custom_call.1} parent=11 // pred_check
          %p196 = pneg %p66
        $region14: #{tpu_custom_call.1} parent=11 // pred_check_branch
          %198 = sbr.rel (%p196) target = $region16
        $region15: #{tpu_custom_call.1} parent=11 // pred_region
          _
        $region16: #{tpu_custom_call.1} parent=11 // pred_fallthru
          _
        // Predicated region
        $region17: #{tpu_custom_call.1} parent=11 // pred_check
          %p199 = pneg %p87
        $region18: #{tpu_custom_call.1} parent=11 // pred_check_branch
          %201 = sbr.rel (%p199) target = $region20
        $region19: #{tpu_custom_call.1} parent=11 // pred_region
          _
        $region20: #{tpu_custom_call.1} parent=11 // pred_fallthru
          _
        // Predicated region
        $region21: #{tpu_custom_call.1} parent=11 // pred_check
          %p202 = pneg %p108
        $region22: #{tpu_custom_call.1} parent=11 // pred_check_branch
          %204 = sbr.rel (%p202) target = $region24
        $region23: #{tpu_custom_call.1} parent=11 // pred_region
          _
        $region24: #{tpu_custom_call.1} parent=11 // pred_fallthru
          _
        // Predicated region
        $region25: #{tpu_custom_call.1} parent=11 // pred_check
          %p205 = pneg %p129
        $region26: #{tpu_custom_call.1} parent=11 // pred_check_branch
          %207 = sbr.rel (%p205) target = $region28
        $region27: #{tpu_custom_call.1} parent=11 // pred_region
          _
        $region28: #{tpu_custom_call.1} parent=11 // pred_fallthru
          _
      $region12: #{tpu_custom_call.1} parent=5 // pred_fallthru
        _
      %p208 = scmp.lt.s32.totalorder %s19, 2
      // Predicated region
      $region29: #{tpu_custom_call.1} parent=5 // pred_check
        %p209 = pneg %p208
      $region30: #{tpu_custom_call.1} parent=5 // pred_check_branch
        %211 = sbr.rel (%p209) target = $region32
      $region31: #{tpu_custom_call.1} parent=5 // pred_region
        // Predicated region
        $region33: #{tpu_custom_call.1} parent=31 // pred_check
          %p212 = pneg %p39
        $region34: #{tpu_custom_call.1} parent=31 // pred_check_branch
          %214 = sbr.rel (%p212) target = $region36
        $region35: #{tpu_custom_call.1} parent=31 // pred_region
          %s215 = smul.u32 4, %s19
          %p216 = scmp.lt.s32.totalorder %s215, 7
          %s217 = scalar_select %p216, %s215, 7
          %s218 = smul.addr %s217, 64
          %s219 = smul.addr %s218, 8
          %s220 = scalar_lea.vmem %s0, %s219
          %s221 = smul.u32 4, %s19
        $region36: #{tpu_custom_call.1} parent=31 // pred_fallthru
          _
      $region32: #{tpu_custom_call.1} parent=5 // pred_fallthru
        _
      %p222 = scmp.le.s32.totalorder 1, %s19
      %p223 = scmp.lt.s32.totalorder %s19, 3
      %p224 = pnand %p222, %p223
      %p225 = pneg %p224
      // Predicated region
      $region37: #{tpu_custom_call.1} parent=5 // pred_check
        _
      $region38: #{tpu_custom_call.1} parent=5 // pred_check_branch
        %227 = sbr.rel (%p224) target = $region40
      $region39: #{tpu_custom_call.1} parent=5 // pred_region
        %s228 = ssub.s32 %s19, 1
        %s229 = smul.u32 4, %s24
        %p230 = scmp.lt.s32.totalorder %s229, 7
        %s231 = scalar_select %p230, %s229, 7
        %s232 = smul.addr %s231, 64
        %s233 = smul.addr %s232, 8
        %s234 = scalar_lea.vmem %s0, %s233
        %p235 = pneg %p45
        %p236 = pneg %p42
        %p237 = pneg %p66
        %p238 = pneg %p63
        %p239 = pneg %p87
        %p240 = pneg %p84
        %p241 = pneg %p108
        %p242 = pneg %p105
        %p243 = pneg %p129
        %p244 = pneg %p126
        %p245 = pneg %p155
        %p246 = pneg %p152
        %s247 = sand.u32 %s142, 1
        %s248 = scalar_lea.sflag [#allocation3], %s247
        %s249 = sand.u32 %s142, 1
        %s250 = smul.addr %s249, 8
        %s251 = scalar_lea.vmem [#allocation2], %s250
        %p252 = pneg %p181
        %p253 = pneg %p178
        %s254 = sand.u32 %s168, 1
        %s255 = scalar_lea.sflag [#allocation5], %s254
        %s256 = sand.u32 %s168, 1
        %s257 = smul.addr %s256, 32
        %s258 = scalar_lea.vmem [#allocation4], %s257
        %s259 = smul.u32 4, %s24
        %p260 = scmp.lt.s32.totalorder %s259, 7
        %s261 = scalar_select %p260, %s259, 7
        %s262 = smul.addr %s261, 64
        %s263 = smul.addr %s262, 8
        %s264 = scalar_lea.vmem %s0, %s263
        %s265 = smul.u32 4, %s24
        %s266 = smul.u32 4, %s24
        %s267 = smul.u32 4, %s24
        %v268 = vld [vmem:[%s264] sm:$0xff]
        %v269 = vld [vmem:[%s264 + $0x8] sm:$0xff]
        %v270 = vld [vmem:[%s264 + $0x10] sm:$0xff]
        %v271 = vld [vmem:[%s264 + $0x18] sm:$0xff]
        %v272 = vld [vmem:[%s264 + $0x20] sm:$0xff]
        %v273 = vld [vmem:[%s264 + $0x28] sm:$0xff]
        %v274 = vld [vmem:[%s264 + $0x30] sm:$0xff]
        %v275 = vld [vmem:[%s264 + $0x38] sm:$0xff]
        %v276 = vld [vmem:[%s264 + $0x40] sm:$0xff]
        %v277 = vld [vmem:[%s264 + $0x48] sm:$0xff]
        %v278 = vld [vmem:[%s264 + $0x50] sm:$0xff]
        %v279 = vld [vmem:[%s264 + $0x58] sm:$0xff]
        %v280 = vld [vmem:[%s264 + $0x60] sm:$0xff]
        %v281 = vld [vmem:[%s264 + $0x68] sm:$0xff]
        %v282 = vld [vmem:[%s264 + $0x70] sm:$0xff]
        %v283 = vld [vmem:[%s264 + $0x78] sm:$0xff]
        %v284 = vld [vmem:[%s264 + $0x80] sm:$0xff]
        %v285 = vld [vmem:[%s264 + $0x88] sm:$0xff]
        %v286 = vld [vmem:[%s264 + $0x90] sm:$0xff]
        %v287 = vld [vmem:[%s264 + $0x98] sm:$0xff]
        %v288 = vld [vmem:[%s264 + $0xa0] sm:$0xff]
        %v289 = vld [vmem:[%s264 + $0xa8] sm:$0xff]
        %v290 = vld [vmem:[%s264 + $0xb0] sm:$0xff]
        %v291 = vld [vmem:[%s264 + $0xb8] sm:$0xff]
        %v292 = vld [vmem:[%s264 + $0xc0] sm:$0xff]
        %v293 = vld [vmem:[%s264 + $0xc8] sm:$0xff]
        %v294 = vld [vmem:[%s264 + $0xd0] sm:$0xff]
        %v295 = vld [vmem:[%s264 + $0xd8] sm:$0xff]
        %v296 = vld [vmem:[%s264 + $0xe0] sm:$0xff]
        %v297 = vld [vmem:[%s264 + $0xe8] sm:$0xff]
        %v298 = vld [vmem:[%s264 + $0xf0] sm:$0xff]
        %v299 = vld [vmem:[%s264 + $0xf8] sm:$0xff]
        %v300 = vld [vmem:[%s264 + $0x100] sm:$0xff]
        %v301 = vld [vmem:[%s264 + $0x108] sm:$0xff]
        %v302 = vld [vmem:[%s264 + $0x110] sm:$0xff]
        %v303 = vld [vmem:[%s264 + $0x118] sm:$0xff]
        %v304 = vld [vmem:[%s264 + $0x120] sm:$0xff]
        %v305 = vld [vmem:[%s264 + $0x128] sm:$0xff]
        %v306 = vld [vmem:[%s264 + $0x130] sm:$0xff]
        %v307 = vld [vmem:[%s264 + $0x138] sm:$0xff]
        %v308 = vld [vmem:[%s264 + $0x140] sm:$0xff]
        %v309 = vld [vmem:[%s264 + $0x148] sm:$0xff]
        %v310 = vld [vmem:[%s264 + $0x150] sm:$0xff]
        %v311 = vld [vmem:[%s264 + $0x158] sm:$0xff]
        %v312 = vld [vmem:[%s264 + $0x160] sm:$0xff]
        %v313 = vld [vmem:[%s264 + $0x168] sm:$0xff]
        %v314 = vld [vmem:[%s264 + $0x170] sm:$0xff]
        %v315 = vld [vmem:[%s264 + $0x178] sm:$0xff]
        %v316 = vld [vmem:[%s264 + $0x180] sm:$0xff]
        %v317 = vld [vmem:[%s264 + $0x188] sm:$0xff]
        %v318 = vld [vmem:[%s264 + $0x190] sm:$0xff]
        %v319 = vld [vmem:[%s264 + $0x198] sm:$0xff]
        %v320 = vld [vmem:[%s264 + $0x1a0] sm:$0xff]
        %v321 = vld [vmem:[%s264 + $0x1a8] sm:$0xff]
        %v322 = vld [vmem:[%s264 + $0x1b0] sm:$0xff]
        %v323 = vld [vmem:[%s264 + $0x1b8] sm:$0xff]
        %v324 = vld [vmem:[%s264 + $0x1c0] sm:$0xff]
        %v325 = vld [vmem:[%s264 + $0x1c8] sm:$0xff]
        %v326 = vld [vmem:[%s264 + $0x1d0] sm:$0xff]
        %v327 = vld [vmem:[%s264 + $0x1d8] sm:$0xff]
        %v328 = vld [vmem:[%s264 + $0x1e0] sm:$0xff]
        %v329 = vld [vmem:[%s264 + $0x1e8] sm:$0xff]
        %v330 = vld [vmem:[%s264 + $0x1f0] sm:$0xff]
        %v331 = vld [vmem:[%s264 + $0x1f8] sm:$0xff]
        %v332 = vld [vmem:[%s264 + $0x200] sm:$0xff]
        %v333 = vld [vmem:[%s264 + $0x208] sm:$0xff]
        %v334 = vld [vmem:[%s264 + $0x210] sm:$0xff]
        %v335 = vld [vmem:[%s264 + $0x218] sm:$0xff]
        %v336 = vld [vmem:[%s264 + $0x220] sm:$0xff]
        %v337 = vld [vmem:[%s264 + $0x228] sm:$0xff]
        %v338 = vld [vmem:[%s264 + $0x230] sm:$0xff]
        %v339 = vld [vmem:[%s264 + $0x238] sm:$0xff]
        %v340 = vld [vmem:[%s264 + $0x240] sm:$0xff]
        %v341 = vld [vmem:[%s264 + $0x248] sm:$0xff]
        %v342 = vld [vmem:[%s264 + $0x250] sm:$0xff]
        %v343 = vld [vmem:[%s264 + $0x258] sm:$0xff]
        %v344 = vld [vmem:[%s264 + $0x260] sm:$0xff]
        %v345 = vld [vmem:[%s264 + $0x268] sm:$0xff]
        %v346 = vld [vmem:[%s264 + $0x270] sm:$0xff]
        %v347 = vld [vmem:[%s264 + $0x278] sm:$0xff]
        %v348 = vld [vmem:[%s264 + $0x280] sm:$0xff]
        %v349 = vld [vmem:[%s264 + $0x288] sm:$0xff]
        %v350 = vld [vmem:[%s264 + $0x290] sm:$0xff]
        %v351 = vld [vmem:[%s264 + $0x298] sm:$0xff]
        %v352 = vld [vmem:[%s264 + $0x2a0] sm:$0xff]
        %v353 = vld [vmem:[%s264 + $0x2a8] sm:$0xff]
        %v354 = vld [vmem:[%s264 + $0x2b0] sm:$0xff]
        %v355 = vld [vmem:[%s264 + $0x2b8] sm:$0xff]
        %v356 = vld [vmem:[%s264 + $0x2c0] sm:$0xff]
        %v357 = vld [vmem:[%s264 + $0x2c8] sm:$0xff]
        %v358 = vld [vmem:[%s264 + $0x2d0] sm:$0xff]
        %v359 = vld [vmem:[%s264 + $0x2d8] sm:$0xff]
        %v360 = vld [vmem:[%s264 + $0x2e0] sm:$0xff]
        %v361 = vld [vmem:[%s264 + $0x2e8] sm:$0xff]
        %v362 = vld [vmem:[%s264 + $0x2f0] sm:$0xff]
        %v363 = vld [vmem:[%s264 + $0x2f8] sm:$0xff]
        %v364 = vld [vmem:[%s264 + $0x300] sm:$0xff]
        %v365 = vld [vmem:[%s264 + $0x308] sm:$0xff]
        %v366 = vld [vmem:[%s264 + $0x310] sm:$0xff]
        %v367 = vld [vmem:[%s264 + $0x318] sm:$0xff]
        %v368 = vld [vmem:[%s264 + $0x320] sm:$0xff]
        %v369 = vld [vmem:[%s264 + $0x328] sm:$0xff]
        %v370 = vld [vmem:[%s264 + $0x330] sm:$0xff]
        %v371 = vld [vmem:[%s264 + $0x338] sm:$0xff]
        %v372 = vld [vmem:[%s264 + $0x340] sm:$0xff]
        %v373 = vld [vmem:[%s264 + $0x348] sm:$0xff]
        %v374 = vld [vmem:[%s264 + $0x350] sm:$0xff]
        %v375 = vld [vmem:[%s264 + $0x358] sm:$0xff]
        %v376 = vld [vmem:[%s264 + $0x360] sm:$0xff]
        %v377 = vld [vmem:[%s264 + $0x368] sm:$0xff]
        %v378 = vld [vmem:[%s264 + $0x370] sm:$0xff]
        %v379 = vld [vmem:[%s264 + $0x378] sm:$0xff]
        %v380 = vld [vmem:[%s264 + $0x380] sm:$0xff]
        %v381 = vld [vmem:[%s264 + $0x388] sm:$0xff]
        %v382 = vld [vmem:[%s264 + $0x390] sm:$0xff]
        %v383 = vld [vmem:[%s264 + $0x398] sm:$0xff]
        %v384 = vld [vmem:[%s264 + $0x3a0] sm:$0xff]
        %v385 = vld [vmem:[%s264 + $0x3a8] sm:$0xff]
        %v386 = vld [vmem:[%s264 + $0x3b0] sm:$0xff]
        %v387 = vld [vmem:[%s264 + $0x3b8] sm:$0xff]
        %v388 = vld [vmem:[%s264 + $0x3c0] sm:$0xff]
        %v389 = vld [vmem:[%s264 + $0x3c8] sm:$0xff]
        %v390 = vld [vmem:[%s264 + $0x3d0] sm:$0xff]
        %v391 = vld [vmem:[%s264 + $0x3d8] sm:$0xff]
        %v392 = vld [vmem:[%s264 + $0x3e0] sm:$0xff]
        %v393 = vld [vmem:[%s264 + $0x3e8] sm:$0xff]
        %v394 = vld [vmem:[%s264 + $0x3f0] sm:$0xff]
        %v395 = vld [vmem:[%s264 + $0x3f8] sm:$0xff]
        %v396 = vld [vmem:[%s264 + $0x400] sm:$0xff]
        %v397 = vld [vmem:[%s264 + $0x408] sm:$0xff]
        %v398 = vld [vmem:[%s264 + $0x410] sm:$0xff]
        %v399 = vld [vmem:[%s264 + $0x418] sm:$0xff]
        %v400 = vld [vmem:[%s264 + $0x420] sm:$0xff]
        %v401 = vld [vmem:[%s264 + $0x428] sm:$0xff]
        %v402 = vld [vmem:[%s264 + $0x430] sm:$0xff]
        %v403 = vld [vmem:[%s264 + $0x438] sm:$0xff]
        %v404 = vld [vmem:[%s264 + $0x440] sm:$0xff]
        %v405 = vld [vmem:[%s264 + $0x448] sm:$0xff]
        %v406 = vld [vmem:[%s264 + $0x450] sm:$0xff]
        %v407 = vld [vmem:[%s264 + $0x458] sm:$0xff]
        %v408 = vld [vmem:[%s264 + $0x460] sm:$0xff]
        %v409 = vld [vmem:[%s264 + $0x468] sm:$0xff]
        %v410 = vld [vmem:[%s264 + $0x470] sm:$0xff]
        %v411 = vld [vmem:[%s264 + $0x478] sm:$0xff]
        %v412 = vld [vmem:[%s264 + $0x480] sm:$0xff]
        %v413 = vld [vmem:[%s264 + $0x488] sm:$0xff]
        %v414 = vld [vmem:[%s264 + $0x490] sm:$0xff]
        %v415 = vld [vmem:[%s264 + $0x498] sm:$0xff]
        %v416 = vld [vmem:[%s264 + $0x4a0] sm:$0xff]
        %v417 = vld [vmem:[%s264 + $0x4a8] sm:$0xff]
        %v418 = vld [vmem:[%s264 + $0x4b0] sm:$0xff]
        %v419 = vld [vmem:[%s264 + $0x4b8] sm:$0xff]
        %v420 = vld [vmem:[%s264 + $0x4c0] sm:$0xff]
        %v421 = vld [vmem:[%s264 + $0x4c8] sm:$0xff]
        %v422 = vld [vmem:[%s264 + $0x4d0] sm:$0xff]
        %v423 = vld [vmem:[%s264 + $0x4d8] sm:$0xff]
        %v424 = vld [vmem:[%s264 + $0x4e0] sm:$0xff]
        %v425 = vld [vmem:[%s264 + $0x4e8] sm:$0xff]
        %v426 = vld [vmem:[%s264 + $0x4f0] sm:$0xff]
        %v427 = vld [vmem:[%s264 + $0x4f8] sm:$0xff]
        %v428 = vld [vmem:[%s264 + $0x500] sm:$0xff]
        %v429 = vld [vmem:[%s264 + $0x508] sm:$0xff]
        %v430 = vld [vmem:[%s264 + $0x510] sm:$0xff]
        %v431 = vld [vmem:[%s264 + $0x518] sm:$0xff]
        %v432 = vld [vmem:[%s264 + $0x520] sm:$0xff]
        %v433 = vld [vmem:[%s264 + $0x528] sm:$0xff]
        %v434 = vld [vmem:[%s264 + $0x530] sm:$0xff]
        %v435 = vld [vmem:[%s264 + $0x538] sm:$0xff]
        %v436 = vld [vmem:[%s264 + $0x540] sm:$0xff]
        %v437 = vld [vmem:[%s264 + $0x548] sm:$0xff]
        %v438 = vld [vmem:[%s264 + $0x550] sm:$0xff]
        %v439 = vld [vmem:[%s264 + $0x558] sm:$0xff]
        %v440 = vld [vmem:[%s264 + $0x560] sm:$0xff]
        %v441 = vld [vmem:[%s264 + $0x568] sm:$0xff]
        %v442 = vld [vmem:[%s264 + $0x570] sm:$0xff]
        %v443 = vld [vmem:[%s264 + $0x578] sm:$0xff]
        %v444 = vld [vmem:[%s264 + $0x580] sm:$0xff]
        %v445 = vld [vmem:[%s264 + $0x588] sm:$0xff]
        %v446 = vld [vmem:[%s264 + $0x590] sm:$0xff]
        %v447 = vld [vmem:[%s264 + $0x598] sm:$0xff]
        %v448 = vld [vmem:[%s264 + $0x5a0] sm:$0xff]
        %v449 = vld [vmem:[%s264 + $0x5a8] sm:$0xff]
        %v450 = vld [vmem:[%s264 + $0x5b0] sm:$0xff]
        %v451 = vld [vmem:[%s264 + $0x5b8] sm:$0xff]
        %v452 = vld [vmem:[%s264 + $0x5c0] sm:$0xff]
        %v453 = vld [vmem:[%s264 + $0x5c8] sm:$0xff]
        %v454 = vld [vmem:[%s264 + $0x5d0] sm:$0xff]
        %v455 = vld [vmem:[%s264 + $0x5d8] sm:$0xff]
        %v456 = vld [vmem:[%s264 + $0x5e0] sm:$0xff]
        %v457 = vld [vmem:[%s264 + $0x5e8] sm:$0xff]
        %v458 = vld [vmem:[%s264 + $0x5f0] sm:$0xff]
        %v459 = vld [vmem:[%s264 + $0x5f8] sm:$0xff]
        %v460 = vld [vmem:[%s264 + $0x600] sm:$0xff]
        %v461 = vld [vmem:[%s264 + $0x608] sm:$0xff]
        %v462 = vld [vmem:[%s264 + $0x610] sm:$0xff]
        %v463 = vld [vmem:[%s264 + $0x618] sm:$0xff]
        %v464 = vld [vmem:[%s264 + $0x620] sm:$0xff]
        %v465 = vld [vmem:[%s264 + $0x628] sm:$0xff]
        %v466 = vld [vmem:[%s264 + $0x630] sm:$0xff]
        %v467 = vld [vmem:[%s264 + $0x638] sm:$0xff]
        %v468 = vld [vmem:[%s264 + $0x640] sm:$0xff]
        %v469 = vld [vmem:[%s264 + $0x648] sm:$0xff]
        %v470 = vld [vmem:[%s264 + $0x650] sm:$0xff]
        %v471 = vld [vmem:[%s264 + $0x658] sm:$0xff]
        %v472 = vld [vmem:[%s264 + $0x660] sm:$0xff]
        %v473 = vld [vmem:[%s264 + $0x668] sm:$0xff]
        %v474 = vld [vmem:[%s264 + $0x670] sm:$0xff]
        %v475 = vld [vmem:[%s264 + $0x678] sm:$0xff]
        %v476 = vld [vmem:[%s264 + $0x680] sm:$0xff]
        %v477 = vld [vmem:[%s264 + $0x688] sm:$0xff]
        %v478 = vld [vmem:[%s264 + $0x690] sm:$0xff]
        %v479 = vld [vmem:[%s264 + $0x698] sm:$0xff]
        %v480 = vld [vmem:[%s264 + $0x6a0] sm:$0xff]
        %v481 = vld [vmem:[%s264 + $0x6a8] sm:$0xff]
        %v482 = vld [vmem:[%s264 + $0x6b0] sm:$0xff]
        %v483 = vld [vmem:[%s264 + $0x6b8] sm:$0xff]
        %v484 = vld [vmem:[%s264 + $0x6c0] sm:$0xff]
        %v485 = vld [vmem:[%s264 + $0x6c8] sm:$0xff]
        %v486 = vld [vmem:[%s264 + $0x6d0] sm:$0xff]
        %v487 = vld [vmem:[%s264 + $0x6d8] sm:$0xff]
        %v488 = vld [vmem:[%s264 + $0x6e0] sm:$0xff]
        %v489 = vld [vmem:[%s264 + $0x6e8] sm:$0xff]
        %v490 = vld [vmem:[%s264 + $0x6f0] sm:$0xff]
        %v491 = vld [vmem:[%s264 + $0x6f8] sm:$0xff]
        %v492 = vld [vmem:[%s264 + $0x700] sm:$0xff]
        %v493 = vld [vmem:[%s264 + $0x708] sm:$0xff]
        %v494 = vld [vmem:[%s264 + $0x710] sm:$0xff]
        %v495 = vld [vmem:[%s264 + $0x718] sm:$0xff]
        %v496 = vld [vmem:[%s264 + $0x720] sm:$0xff]
        %v497 = vld [vmem:[%s264 + $0x728] sm:$0xff]
        %v498 = vld [vmem:[%s264 + $0x730] sm:$0xff]
        %v499 = vld [vmem:[%s264 + $0x738] sm:$0xff]
        %v500 = vld [vmem:[%s264 + $0x740] sm:$0xff]
        %v501 = vld [vmem:[%s264 + $0x748] sm:$0xff]
        %v502 = vld [vmem:[%s264 + $0x750] sm:$0xff]
        %v503 = vld [vmem:[%s264 + $0x758] sm:$0xff]
        %v504 = vld [vmem:[%s264 + $0x760] sm:$0xff]
        %v505 = vld [vmem:[%s264 + $0x768] sm:$0xff]
        %v506 = vld [vmem:[%s264 + $0x770] sm:$0xff]
        %v507 = vld [vmem:[%s264 + $0x778] sm:$0xff]
        %v508 = vld [vmem:[%s264 + $0x780] sm:$0xff]
        %v509 = vld [vmem:[%s264 + $0x788] sm:$0xff]
        %v510 = vld [vmem:[%s264 + $0x790] sm:$0xff]
        %v511 = vld [vmem:[%s264 + $0x798] sm:$0xff]
        %v512 = vld [vmem:[%s264 + $0x7a0] sm:$0xff]
        %v513 = vld [vmem:[%s264 + $0x7a8] sm:$0xff]
        %v514 = vld [vmem:[%s264 + $0x7b0] sm:$0xff]
        %v515 = vld [vmem:[%s264 + $0x7b8] sm:$0xff]
        %v516 = vld [vmem:[%s264 + $0x7c0] sm:$0xff]
        %v517 = vld [vmem:[%s264 + $0x7c8] sm:$0xff]
        %v518 = vld [vmem:[%s264 + $0x7d0] sm:$0xff]
        %v519 = vld [vmem:[%s264 + $0x7d8] sm:$0xff]
        %v520 = vld [vmem:[%s264 + $0x7e0] sm:$0xff]
        %v521 = vld [vmem:[%s264 + $0x7e8] sm:$0xff]
        %v522 = vld [vmem:[%s264 + $0x7f0] sm:$0xff]
        %v523 = vld [vmem:[%s264 + $0x7f8] sm:$0xff]
        %524 = vxpose.xlu0.b32.start [1/16] %v268, 128
        %525 = vxpose.xlu0.b32.cont [2/16] %v269, 128
        %526 = vxpose.xlu0.b32.cont [3/16] %v270, 128
        %527 = vxpose.xlu0.b32.cont [4/16] %v271, 128
        %528 = vxpose.xlu0.b32.cont [5/16] %v272, 128
        %529 = vxpose.xlu0.b32.cont [6/16] %v273, 128
        %530 = vxpose.xlu0.b32.cont [7/16] %v274, 128
        %531 = vxpose.xlu0.b32.cont [8/16] %v275, 128
        %532 = vxpose.xlu0.b32.cont [9/16] %v276, 128
        %533 = vxpose.xlu0.b32.cont [10/16] %v277, 128
        %534 = vxpose.xlu0.b32.cont [11/16] %v278, 128
        %535 = vxpose.xlu0.b32.cont [12/16] %v279, 128
        %536 = vxpose.xlu0.b32.cont [13/16] %v280, 128
        %537 = vxpose.xlu0.b32.cont [14/16] %v281, 128
        %538 = vxpose.xlu0.b32.cont [15/16] %v282, 128
        %539 = vxpose.xlu0.b32.end [16/16] %v283, 128
        %v540 = vpop.trf.xlu0
        %v541 = vpop.trf.xlu0
        %v542 = vpop.trf.xlu0
        %v543 = vpop.trf.xlu0
        %v544 = vpop.trf.xlu0
        %v545 = vpop.trf.xlu0
        %v546 = vpop.trf.xlu0
        %v547 = vpop.trf.xlu0
        %v548 = vpop.trf.xlu0
        %v549 = vpop.trf.xlu0
        %v550 = vpop.trf.xlu0
        %v551 = vpop.trf.xlu0
        %v552 = vpop.trf.xlu0
        %v553 = vpop.trf.xlu0
        %v554 = vpop.trf.xlu0
        %v555 = vpop.trf.xlu0
        %556 = vxpose.xlu0.b32.start [1/16] %v284, 128
        %557 = vxpose.xlu0.b32.cont [2/16] %v285, 128
        %558 = vxpose.xlu0.b32.cont [3/16] %v286, 128
        %559 = vxpose.xlu0.b32.cont [4/16] %v287, 128
        %560 = vxpose.xlu0.b32.cont [5/16] %v288, 128
        %561 = vxpose.xlu0.b32.cont [6/16] %v289, 128
        %562 = vxpose.xlu0.b32.cont [7/16] %v290, 128
        %563 = vxpose.xlu0.b32.cont [8/16] %v291, 128
        %564 = vxpose.xlu0.b32.cont [9/16] %v292, 128
        %565 = vxpose.xlu0.b32.cont [10/16] %v293, 128
        %566 = vxpose.xlu0.b32.cont [11/16] %v294, 128
        %567 = vxpose.xlu0.b32.cont [12/16] %v295, 128
        %568 = vxpose.xlu0.b32.cont [13/16] %v296, 128
        %569 = vxpose.xlu0.b32.cont [14/16] %v297, 128
        %570 = vxpose.xlu0.b32.cont [15/16] %v298, 128
        %571 = vxpose.xlu0.b32.end [16/16] %v299, 128
        %v572 = vpop.trf.xlu0
        %v573 = vpop.trf.xlu0
        %v574 = vpop.trf.xlu0
        %v575 = vpop.trf.xlu0
        %v576 = vpop.trf.xlu0
        %v577 = vpop.trf.xlu0
        %v578 = vpop.trf.xlu0
        %v579 = vpop.trf.xlu0
        %v580 = vpop.trf.xlu0
        %v581 = vpop.trf.xlu0
        %v582 = vpop.trf.xlu0
        %v583 = vpop.trf.xlu0
        %v584 = vpop.trf.xlu0
        %v585 = vpop.trf.xlu0
        %v586 = vpop.trf.xlu0
        %v587 = vpop.trf.xlu0
        %588 = vxpose.xlu0.b32.start [1/16] %v300, 128
        %589 = vxpose.xlu0.b32.cont [2/16] %v301, 128
        %590 = vxpose.xlu0.b32.cont [3/16] %v302, 128
        %591 = vxpose.xlu0.b32.cont [4/16] %v303, 128
        %592 = vxpose.xlu0.b32.cont [5/16] %v304, 128
        %593 = vxpose.xlu0.b32.cont [6/16] %v305, 128
        %594 = vxpose.xlu0.b32.cont [7/16] %v306, 128
        %595 = vxpose.xlu0.b32.cont [8/16] %v307, 128
        %596 = vxpose.xlu0.b32.cont [9/16] %v308, 128
        %597 = vxpose.xlu0.b32.cont [10/16] %v309, 128
        %598 = vxpose.xlu0.b32.cont [11/16] %v310, 128
        %599 = vxpose.xlu0.b32.cont [12/16] %v311, 128
        %600 = vxpose.xlu0.b32.cont [13/16] %v312, 128
        %601 = vxpose.xlu0.b32.cont [14/16] %v313, 128
        %602 = vxpose.xlu0.b32.cont [15/16] %v314, 128
        %603 = vxpose.xlu0.b32.end [16/16] %v315, 128
        %v604 = vpop.trf.xlu0
        %v605 = vpop.trf.xlu0
        %v606 = vpop.trf.xlu0
        %v607 = vpop.trf.xlu0
        %v608 = vpop.trf.xlu0
        %v609 = vpop.trf.xlu0
        %v610 = vpop.trf.xlu0
        %v611 = vpop.trf.xlu0
        %v612 = vpop.trf.xlu0
        %v613 = vpop.trf.xlu0
        %v614 = vpop.trf.xlu0
        %v615 = vpop.trf.xlu0
        %v616 = vpop.trf.xlu0
        %v617 = vpop.trf.xlu0
        %v618 = vpop.trf.xlu0
        %v619 = vpop.trf.xlu0
        %620 = vxpose.xlu0.b32.start [1/16] %v316, 128
        %621 = vxpose.xlu0.b32.cont [2/16] %v317, 128
        %622 = vxpose.xlu0.b32.cont [3/16] %v318, 128
        %623 = vxpose.xlu0.b32.cont [4/16] %v319, 128
        %624 = vxpose.xlu0.b32.cont [5/16] %v320, 128
        %625 = vxpose.xlu0.b32.cont [6/16] %v321, 128
        %626 = vxpose.xlu0.b32.cont [7/16] %v322, 128
        %627 = vxpose.xlu0.b32.cont [8/16] %v323, 128
        %628 = vxpose.xlu0.b32.cont [9/16] %v324, 128
        %629 = vxpose.xlu0.b32.cont [10/16] %v325, 128
        %630 = vxpose.xlu0.b32.cont [11/16] %v326, 128
        %631 = vxpose.xlu0.b32.cont [12/16] %v327, 128
        %632 = vxpose.xlu0.b32.cont [13/16] %v328, 128
        %633 = vxpose.xlu0.b32.cont [14/16] %v329, 128
        %634 = vxpose.xlu0.b32.cont [15/16] %v330, 128
        %635 = vxpose.xlu0.b32.end [16/16] %v331, 128
        %v636 = vpop.trf.xlu0
        %v637 = vpop.trf.xlu0
        %v638 = vpop.trf.xlu0
        %v639 = vpop.trf.xlu0
        %v640 = vpop.trf.xlu0
        %v641 = vpop.trf.xlu0
        %v642 = vpop.trf.xlu0
        %v643 = vpop.trf.xlu0
        %v644 = vpop.trf.xlu0
        %v645 = vpop.trf.xlu0
        %v646 = vpop.trf.xlu0
        %v647 = vpop.trf.xlu0
        %v648 = vpop.trf.xlu0
        %v649 = vpop.trf.xlu0
        %v650 = vpop.trf.xlu0
        %v651 = vpop.trf.xlu0
        %652 = vxpose.xlu0.b32.start [1/16] %v332, 128
        %653 = vxpose.xlu0.b32.cont [2/16] %v333, 128
        %654 = vxpose.xlu0.b32.cont [3/16] %v334, 128
        %655 = vxpose.xlu0.b32.cont [4/16] %v335, 128
        %656 = vxpose.xlu0.b32.cont [5/16] %v336, 128
        %657 = vxpose.xlu0.b32.cont [6/16] %v337, 128
        %658 = vxpose.xlu0.b32.cont [7/16] %v338, 128
        %659 = vxpose.xlu0.b32.cont [8/16] %v339, 128
        %660 = vxpose.xlu0.b32.cont [9/16] %v340, 128
        %661 = vxpose.xlu0.b32.cont [10/16] %v341, 128
        %662 = vxpose.xlu0.b32.cont [11/16] %v342, 128
        %663 = vxpose.xlu0.b32.cont [12/16] %v343, 128
        %664 = vxpose.xlu0.b32.cont [13/16] %v344, 128
        %665 = vxpose.xlu0.b32.cont [14/16] %v345, 128
        %666 = vxpose.xlu0.b32.cont [15/16] %v346, 128
        %667 = vxpose.xlu0.b32.end [16/16] %v347, 128
        %v668 = vpop.trf.xlu0
        %v669 = vpop.trf.xlu0
        %v670 = vpop.trf.xlu0
        %v671 = vpop.trf.xlu0
        %v672 = vpop.trf.xlu0
        %v673 = vpop.trf.xlu0
        %v674 = vpop.trf.xlu0
        %v675 = vpop.trf.xlu0
        %v676 = vpop.trf.xlu0
        %v677 = vpop.trf.xlu0
        %v678 = vpop.trf.xlu0
        %v679 = vpop.trf.xlu0
        %v680 = vpop.trf.xlu0
        %v681 = vpop.trf.xlu0
        %v682 = vpop.trf.xlu0
        %v683 = vpop.trf.xlu0
        %684 = vxpose.xlu0.b32.start [1/16] %v348, 128
        %685 = vxpose.xlu0.b32.cont [2/16] %v349, 128
        %686 = vxpose.xlu0.b32.cont [3/16] %v350, 128
        %687 = vxpose.xlu0.b32.cont [4/16] %v351, 128
        %688 = vxpose.xlu0.b32.cont [5/16] %v352, 128
        %689 = vxpose.xlu0.b32.cont [6/16] %v353, 128
        %690 = vxpose.xlu0.b32.cont [7/16] %v354, 128
        %691 = vxpose.xlu0.b32.cont [8/16] %v355, 128
        %692 = vxpose.xlu0.b32.cont [9/16] %v356, 128
        %693 = vxpose.xlu0.b32.cont [10/16] %v357, 128
        %694 = vxpose.xlu0.b32.cont [11/16] %v358, 128
        %695 = vxpose.xlu0.b32.cont [12/16] %v359, 128
        %696 = vxpose.xlu0.b32.cont [13/16] %v360, 128
        %697 = vxpose.xlu0.b32.cont [14/16] %v361, 128
        %698 = vxpose.xlu0.b32.cont [15/16] %v362, 128
        %699 = vxpose.xlu0.b32.end [16/16] %v363, 128
        %v700 = vpop.trf.xlu0
        %v701 = vpop.trf.xlu0
        %v702 = vpop.trf.xlu0
        %v703 = vpop.trf.xlu0
        %v704 = vpop.trf.xlu0
        %v705 = vpop.trf.xlu0
        %v706 = vpop.trf.xlu0
        %v707 = vpop.trf.xlu0
        %v708 = vpop.trf.xlu0
        %v709 = vpop.trf.xlu0
        %v710 = vpop.trf.xlu0
        %v711 = vpop.trf.xlu0
        %v712 = vpop.trf.xlu0
        %v713 = vpop.trf.xlu0
        %v714 = vpop.trf.xlu0
        %v715 = vpop.trf.xlu0
        %716 = vxpose.xlu0.b32.start [1/16] %v364, 128
        %717 = vxpose.xlu0.b32.cont [2/16] %v365, 128
        %718 = vxpose.xlu0.b32.cont [3/16] %v366, 128
        %719 = vxpose.xlu0.b32.cont [4/16] %v367, 128
        %720 = vxpose.xlu0.b32.cont [5/16] %v368, 128
        %721 = vxpose.xlu0.b32.cont [6/16] %v369, 128
        %722 = vxpose.xlu0.b32.cont [7/16] %v370, 128
        %723 = vxpose.xlu0.b32.cont [8/16] %v371, 128
        %724 = vxpose.xlu0.b32.cont [9/16] %v372, 128
        %725 = vxpose.xlu0.b32.cont [10/16] %v373, 128
        %726 = vxpose.xlu0.b32.cont [11/16] %v374, 128
        %727 = vxpose.xlu0.b32.cont [12/16] %v375, 128
        %728 = vxpose.xlu0.b32.cont [13/16] %v376, 128
        %729 = vxpose.xlu0.b32.cont [14/16] %v377, 128
        %730 = vxpose.xlu0.b32.cont [15/16] %v378, 128
        %731 = vxpose.xlu0.b32.end [16/16] %v379, 128
        %v732 = vpop.trf.xlu0
        %v733 = vpop.trf.xlu0
        %v734 = vpop.trf.xlu0
        %v735 = vpop.trf.xlu0
        %v736 = vpop.trf.xlu0
        %v737 = vpop.trf.xlu0
        %v738 = vpop.trf.xlu0
        %v739 = vpop.trf.xlu0
        %v740 = vpop.trf.xlu0
        %v741 = vpop.trf.xlu0
        %v742 = vpop.trf.xlu0
        %v743 = vpop.trf.xlu0
        %v744 = vpop.trf.xlu0
        %v745 = vpop.trf.xlu0
        %v746 = vpop.trf.xlu0
        %v747 = vpop.trf.xlu0
        %748 = vxpose.xlu0.b32.start [1/16] %v380, 128
        %749 = vxpose.xlu0.b32.cont [2/16] %v381, 128
        %750 = vxpose.xlu0.b32.cont [3/16] %v382, 128
        %751 = vxpose.xlu0.b32.cont [4/16] %v383, 128
        %752 = vxpose.xlu0.b32.cont [5/16] %v384, 128
        %753 = vxpose.xlu0.b32.cont [6/16] %v385, 128
        %754 = vxpose.xlu0.b32.cont [7/16] %v386, 128
        %755 = vxpose.xlu0.b32.cont [8/16] %v387, 128
        %756 = vxpose.xlu0.b32.cont [9/16] %v388, 128
        %757 = vxpose.xlu0.b32.cont [10/16] %v389, 128
        %758 = vxpose.xlu0.b32.cont [11/16] %v390, 128
        %759 = vxpose.xlu0.b32.cont [12/16] %v391, 128
        %760 = vxpose.xlu0.b32.cont [13/16] %v392, 128
        %761 = vxpose.xlu0.b32.cont [14/16] %v393, 128
        %762 = vxpose.xlu0.b32.cont [15/16] %v394, 128
        %763 = vxpose.xlu0.b32.end [16/16] %v395, 128
        %v764 = vpop.trf.xlu0
        %v765 = vpop.trf.xlu0
        %v766 = vpop.trf.xlu0
        %v767 = vpop.trf.xlu0
        %v768 = vpop.trf.xlu0
        %v769 = vpop.trf.xlu0
        %v770 = vpop.trf.xlu0
        %v771 = vpop.trf.xlu0
        %v772 = vpop.trf.xlu0
        %v773 = vpop.trf.xlu0
        %v774 = vpop.trf.xlu0
        %v775 = vpop.trf.xlu0
        %v776 = vpop.trf.xlu0
        %v777 = vpop.trf.xlu0
        %v778 = vpop.trf.xlu0
        %v779 = vpop.trf.xlu0
        %780 = vxpose.xlu0.b32.start [1/16] %v396, 128
        %781 = vxpose.xlu0.b32.cont [2/16] %v397, 128
        %782 = vxpose.xlu0.b32.cont [3/16] %v398, 128
        %783 = vxpose.xlu0.b32.cont [4/16] %v399, 128
        %784 = vxpose.xlu0.b32.cont [5/16] %v400, 128
        %785 = vxpose.xlu0.b32.cont [6/16] %v401, 128
        %786 = vxpose.xlu0.b32.cont [7/16] %v402, 128
        %787 = vxpose.xlu0.b32.cont [8/16] %v403, 128
        %788 = vxpose.xlu0.b32.cont [9/16] %v404, 128
        %789 = vxpose.xlu0.b32.cont [10/16] %v405, 128
        %790 = vxpose.xlu0.b32.cont [11/16] %v406, 128
        %791 = vxpose.xlu0.b32.cont [12/16] %v407, 128
        %792 = vxpose.xlu0.b32.cont [13/16] %v408, 128
        %793 = vxpose.xlu0.b32.cont [14/16] %v409, 128
        %794 = vxpose.xlu0.b32.cont [15/16] %v410, 128
        %795 = vxpose.xlu0.b32.end [16/16] %v411, 128
        %v796 = vpop.trf.xlu0
        %v797 = vpop.trf.xlu0
        %v798 = vpop.trf.xlu0
        %v799 = vpop.trf.xlu0
        %v800 = vpop.trf.xlu0
        %v801 = vpop.trf.xlu0
        %v802 = vpop.trf.xlu0
        %v803 = vpop.trf.xlu0
        %v804 = vpop.trf.xlu0
        %v805 = vpop.trf.xlu0
        %v806 = vpop.trf.xlu0
        %v807 = vpop.trf.xlu0
        %v808 = vpop.trf.xlu0
        %v809 = vpop.trf.xlu0
        %v810 = vpop.trf.xlu0
        %v811 = vpop.trf.xlu0
        %812 = vxpose.xlu0.b32.start [1/16] %v412, 128
        %813 = vxpose.xlu0.b32.cont [2/16] %v413, 128
        %814 = vxpose.xlu0.b32.cont [3/16] %v414, 128
        %815 = vxpose.xlu0.b32.cont [4/16] %v415, 128
        %816 = vxpose.xlu0.b32.cont [5/16] %v416, 128
        %817 = vxpose.xlu0.b32.cont [6/16] %v417, 128
        %818 = vxpose.xlu0.b32.cont [7/16] %v418, 128
        %819 = vxpose.xlu0.b32.cont [8/16] %v419, 128
        %820 = vxpose.xlu0.b32.cont [9/16] %v420, 128
        %821 = vxpose.xlu0.b32.cont [10/16] %v421, 128
        %822 = vxpose.xlu0.b32.cont [11/16] %v422, 128
        %823 = vxpose.xlu0.b32.cont [12/16] %v423, 128
        %824 = vxpose.xlu0.b32.cont [13/16] %v424, 128
        %825 = vxpose.xlu0.b32.cont [14/16] %v425, 128
        %826 = vxpose.xlu0.b32.cont [15/16] %v426, 128
        %827 = vxpose.xlu0.b32.end [16/16] %v427, 128
        %v828 = vpop.trf.xlu0
        %v829 = vpop.trf.xlu0
        %v830 = vpop.trf.xlu0
        %v831 = vpop.trf.xlu0
        %v832 = vpop.trf.xlu0
        %v833 = vpop.trf.xlu0
        %v834 = vpop.trf.xlu0
        %v835 = vpop.trf.xlu0
        %v836 = vpop.trf.xlu0
        %v837 = vpop.trf.xlu0
        %v838 = vpop.trf.xlu0
        %v839 = vpop.trf.xlu0
        %v840 = vpop.trf.xlu0
        %v841 = vpop.trf.xlu0
        %v842 = vpop.trf.xlu0
        %v843 = vpop.trf.xlu0
        %844 = vxpose.xlu0.b32.start [1/16] %v428, 128
        %845 = vxpose.xlu0.b32.cont [2/16] %v429, 128
        %846 = vxpose.xlu0.b32.cont [3/16] %v430, 128
        %847 = vxpose.xlu0.b32.cont [4/16] %v431, 128
        %848 = vxpose.xlu0.b32.cont [5/16] %v432, 128
        %849 = vxpose.xlu0.b32.cont [6/16] %v433, 128
        %850 = vxpose.xlu0.b32.cont [7/16] %v434, 128
        %851 = vxpose.xlu0.b32.cont [8/16] %v435, 128
        %852 = vxpose.xlu0.b32.cont [9/16] %v436, 128
        %853 = vxpose.xlu0.b32.cont [10/16] %v437, 128
        %854 = vxpose.xlu0.b32.cont [11/16] %v438, 128
        %855 = vxpose.xlu0.b32.cont [12/16] %v439, 128
        %856 = vxpose.xlu0.b32.cont [13/16] %v440, 128
        %857 = vxpose.xlu0.b32.cont [14/16] %v441, 128
        %858 = vxpose.xlu0.b32.cont [15/16] %v442, 128
        %859 = vxpose.xlu0.b32.end [16/16] %v443, 128
        %v860 = vpop.trf.xlu0
        %v861 = vpop.trf.xlu0
        %v862 = vpop.trf.xlu0
        %v863 = vpop.trf.xlu0
        %v864 = vpop.trf.xlu0
        %v865 = vpop.trf.xlu0
        %v866 = vpop.trf.xlu0
        %v867 = vpop.trf.xlu0
        %v868 = vpop.trf.xlu0
        %v869 = vpop.trf.xlu0
        %v870 = vpop.trf.xlu0
        %v871 = vpop.trf.xlu0
        %v872 = vpop.trf.xlu0
        %v873 = vpop.trf.xlu0
        %v874 = vpop.trf.xlu0
        %v875 = vpop.trf.xlu0
        %876 = vxpose.xlu0.b32.start [1/16] %v444, 128
        %877 = vxpose.xlu0.b32.cont [2/16] %v445, 128
        %878 = vxpose.xlu0.b32.cont [3/16] %v446, 128
        %879 = vxpose.xlu0.b32.cont [4/16] %v447, 128
        %880 = vxpose.xlu0.b32.cont [5/16] %v448, 128
        %881 = vxpose.xlu0.b32.cont [6/16] %v449, 128
        %882 = vxpose.xlu0.b32.cont [7/16] %v450, 128
        %883 = vxpose.xlu0.b32.cont [8/16] %v451, 128
        %884 = vxpose.xlu0.b32.cont [9/16] %v452, 128
        %885 = vxpose.xlu0.b32.cont [10/16] %v453, 128
        %886 = vxpose.xlu0.b32.cont [11/16] %v454, 128
        %887 = vxpose.xlu0.b32.cont [12/16] %v455, 128
        %888 = vxpose.xlu0.b32.cont [13/16] %v456, 128
        %889 = vxpose.xlu0.b32.cont [14/16] %v457, 128
        %890 = vxpose.xlu0.b32.cont [15/16] %v458, 128
        %891 = vxpose.xlu0.b32.end [16/16] %v459, 128
        %v892 = vpop.trf.xlu0
        %v893 = vpop.trf.xlu0
        %v894 = vpop.trf.xlu0
        %v895 = vpop.trf.xlu0
        %v896 = vpop.trf.xlu0
        %v897 = vpop.trf.xlu0
        %v898 = vpop.trf.xlu0
        %v899 = vpop.trf.xlu0
        %v900 = vpop.trf.xlu0
        %v901 = vpop.trf.xlu0
        %v902 = vpop.trf.xlu0
        %v903 = vpop.trf.xlu0
        %v904 = vpop.trf.xlu0
        %v905 = vpop.trf.xlu0
        %v906 = vpop.trf.xlu0
        %v907 = vpop.trf.xlu0
        %908 = vxpose.xlu0.b32.start [1/16] %v460, 128
        %909 = vxpose.xlu0.b32.cont [2/16] %v461, 128
        %910 = vxpose.xlu0.b32.cont [3/16] %v462, 128
        %911 = vxpose.xlu0.b32.cont [4/16] %v463, 128
        %912 = vxpose.xlu0.b32.cont [5/16] %v464, 128
        %913 = vxpose.xlu0.b32.cont [6/16] %v465, 128
        %914 = vxpose.xlu0.b32.cont [7/16] %v466, 128
        %915 = vxpose.xlu0.b32.cont [8/16] %v467, 128
        %916 = vxpose.xlu0.b32.cont [9/16] %v468, 128
        %917 = vxpose.xlu0.b32.cont [10/16] %v469, 128
        %918 = vxpose.xlu0.b32.cont [11/16] %v470, 128
        %919 = vxpose.xlu0.b32.cont [12/16] %v471, 128
        %920 = vxpose.xlu0.b32.cont [13/16] %v472, 128
        %921 = vxpose.xlu0.b32.cont [14/16] %v473, 128
        %922 = vxpose.xlu0.b32.cont [15/16] %v474, 128
        %923 = vxpose.xlu0.b32.end [16/16] %v475, 128
        %v924 = vpop.trf.xlu0
        %v925 = vpop.trf.xlu0
        %v926 = vpop.trf.xlu0
        %v927 = vpop.trf.xlu0
        %v928 = vpop.trf.xlu0
        %v929 = vpop.trf.xlu0
        %v930 = vpop.trf.xlu0
        %v931 = vpop.trf.xlu0
        %v932 = vpop.trf.xlu0
        %v933 = vpop.trf.xlu0
        %v934 = vpop.trf.xlu0
        %v935 = vpop.trf.xlu0
        %v936 = vpop.trf.xlu0
        %v937 = vpop.trf.xlu0
        %v938 = vpop.trf.xlu0
        %v939 = vpop.trf.xlu0
        %940 = vxpose.xlu0.b32.start [1/16] %v476, 128
        %941 = vxpose.xlu0.b32.cont [2/16] %v477, 128
        %942 = vxpose.xlu0.b32.cont [3/16] %v478, 128
        %943 = vxpose.xlu0.b32.cont [4/16] %v479, 128
        %944 = vxpose.xlu0.b32.cont [5/16] %v480, 128
        %945 = vxpose.xlu0.b32.cont [6/16] %v481, 128
        %946 = vxpose.xlu0.b32.cont [7/16] %v482, 128
        %947 = vxpose.xlu0.b32.cont [8/16] %v483, 128
        %948 = vxpose.xlu0.b32.cont [9/16] %v484, 128
        %949 = vxpose.xlu0.b32.cont [10/16] %v485, 128
        %950 = vxpose.xlu0.b32.cont [11/16] %v486, 128
        %951 = vxpose.xlu0.b32.cont [12/16] %v487, 128
        %952 = vxpose.xlu0.b32.cont [13/16] %v488, 128
        %953 = vxpose.xlu0.b32.cont [14/16] %v489, 128
        %954 = vxpose.xlu0.b32.cont [15/16] %v490, 128
        %955 = vxpose.xlu0.b32.end [16/16] %v491, 128
        %v956 = vpop.trf.xlu0
        %v957 = vpop.trf.xlu0
        %v958 = vpop.trf.xlu0
        %v959 = vpop.trf.xlu0
        %v960 = vpop.trf.xlu0
        %v961 = vpop.trf.xlu0
        %v962 = vpop.trf.xlu0
        %v963 = vpop.trf.xlu0
        %v964 = vpop.trf.xlu0
        %v965 = vpop.trf.xlu0
        %v966 = vpop.trf.xlu0
        %v967 = vpop.trf.xlu0
        %v968 = vpop.trf.xlu0
        %v969 = vpop.trf.xlu0
        %v970 = vpop.trf.xlu0
        %v971 = vpop.trf.xlu0
        %972 = vxpose.xlu0.b32.start [1/16] %v492, 128
        %973 = vxpose.xlu0.b32.cont [2/16] %v493, 128
        %974 = vxpose.xlu0.b32.cont [3/16] %v494, 128
        %975 = vxpose.xlu0.b32.cont [4/16] %v495, 128
        %976 = vxpose.xlu0.b32.cont [5/16] %v496, 128
        %977 = vxpose.xlu0.b32.cont [6/16] %v497, 128
        %978 = vxpose.xlu0.b32.cont [7/16] %v498, 128
        %979 = vxpose.xlu0.b32.cont [8/16] %v499, 128
        %980 = vxpose.xlu0.b32.cont [9/16] %v500, 128
        %981 = vxpose.xlu0.b32.cont [10/16] %v501, 128
        %982 = vxpose.xlu0.b32.cont [11/16] %v502, 128
        %983 = vxpose.xlu0.b32.cont [12/16] %v503, 128
        %984 = vxpose.xlu0.b32.cont [13/16] %v504, 128
        %985 = vxpose.xlu0.b32.cont [14/16] %v505, 128
        %986 = vxpose.xlu0.b32.cont [15/16] %v506, 128
        %987 = vxpose.xlu0.b32.end [16/16] %v507, 128
        %v988 = vpop.trf.xlu0
        %v989 = vpop.trf.xlu0
        %v990 = vpop.trf.xlu0
        %v991 = vpop.trf.xlu0
        %v992 = vpop.trf.xlu0
        %v993 = vpop.trf.xlu0
        %v994 = vpop.trf.xlu0
        %v995 = vpop.trf.xlu0
        %v996 = vpop.trf.xlu0
        %v997 = vpop.trf.xlu0
        %v998 = vpop.trf.xlu0
        %v999 = vpop.trf.xlu0
        %v1000 = vpop.trf.xlu0
        %v1001 = vpop.trf.xlu0
        %v1002 = vpop.trf.xlu0
        %v1003 = vpop.trf.xlu0
        %1004 = vxpose.xlu0.b32.start [1/16] %v508, 128
        %1005 = vxpose.xlu0.b32.cont [2/16] %v509, 128
        %1006 = vxpose.xlu0.b32.cont [3/16] %v510, 128
        %1007 = vxpose.xlu0.b32.cont [4/16] %v511, 128
        %1008 = vxpose.xlu0.b32.cont [5/16] %v512, 128
        %1009 = vxpose.xlu0.b32.cont [6/16] %v513, 128
        %1010 = vxpose.xlu0.b32.cont [7/16] %v514, 128
        %1011 = vxpose.xlu0.b32.cont [8/16] %v515, 128
        %1012 = vxpose.xlu0.b32.cont [9/16] %v516, 128
        %1013 = vxpose.xlu0.b32.cont [10/16] %v517, 128
        %1014 = vxpose.xlu0.b32.cont [11/16] %v518, 128
        %1015 = vxpose.xlu0.b32.cont [12/16] %v519, 128
        %1016 = vxpose.xlu0.b32.cont [13/16] %v520, 128
        %1017 = vxpose.xlu0.b32.cont [14/16] %v521, 128
        %1018 = vxpose.xlu0.b32.cont [15/16] %v522, 128
        %1019 = vxpose.xlu0.b32.end [16/16] %v523, 128
        %v1020 = vpop.trf.xlu0
        %v1021 = vpop.trf.xlu0
        %v1022 = vpop.trf.xlu0
        %v1023 = vpop.trf.xlu0
        %v1024 = vpop.trf.xlu0
        %v1025 = vpop.trf.xlu0
        %v1026 = vpop.trf.xlu0
        %v1027 = vpop.trf.xlu0
        %v1028 = vpop.trf.xlu0
        %v1029 = vpop.trf.xlu0
        %v1030 = vpop.trf.xlu0
        %v1031 = vpop.trf.xlu0
        %v1032 = vpop.trf.xlu0
        %v1033 = vpop.trf.xlu0
        %v1034 = vpop.trf.xlu0
        %v1035 = vpop.trf.xlu0
        %v1036 = vld [vmem:[%s1] sm:$0xff]
        %v1037 = vld [vmem:[%s1 + $0x8] sm:$0xff]
        %v1038 = vld [vmem:[%s1 + $0x10] sm:$0xff]
        %v1039 = vld [vmem:[%s1 + $0x18] sm:$0xff]
        %v1040 = vld [vmem:[%s1 + $0x20] sm:$0xff]
        %v1041 = vld [vmem:[%s1 + $0x28] sm:$0xff]
        %v1042 = vld [vmem:[%s1 + $0x30] sm:$0xff]
        %v1043 = vld [vmem:[%s1 + $0x38] sm:$0xff]
        %v1044 = vld [vmem:[%s1 + $0x40] sm:$0xff]
        %v1045 = vld [vmem:[%s1 + $0x48] sm:$0xff]
        %v1046 = vld [vmem:[%s1 + $0x50] sm:$0xff]
        %v1047 = vld [vmem:[%s1 + $0x58] sm:$0xff]
        %v1048 = vld [vmem:[%s1 + $0x60] sm:$0xff]
        %v1049 = vld [vmem:[%s1 + $0x68] sm:$0xff]
        %v1050 = vld [vmem:[%s1 + $0x70] sm:$0xff]
        %v1051 = vld [vmem:[%s1 + $0x78] sm:$0xff]
        %v1052 = vld [vmem:[%s1 + $0x80] sm:$0xff]
        %v1053 = vld [vmem:[%s1 + $0x88] sm:$0xff]
        %v1054 = vld [vmem:[%s1 + $0x90] sm:$0xff]
        %v1055 = vld [vmem:[%s1 + $0x98] sm:$0xff]
        %v1056 = vld [vmem:[%s1 + $0xa0] sm:$0xff]
        %v1057 = vld [vmem:[%s1 + $0xa8] sm:$0xff]
        %v1058 = vld [vmem:[%s1 + $0xb0] sm:$0xff]
        %v1059 = vld [vmem:[%s1 + $0xb8] sm:$0xff]
        %v1060 = vld [vmem:[%s1 + $0xc0] sm:$0xff]
        %v1061 = vld [vmem:[%s1 + $0xc8] sm:$0xff]
        %v1062 = vld [vmem:[%s1 + $0xd0] sm:$0xff]
        %v1063 = vld [vmem:[%s1 + $0xd8] sm:$0xff]
        %v1064 = vld [vmem:[%s1 + $0xe0] sm:$0xff]
        %v1065 = vld [vmem:[%s1 + $0xe8] sm:$0xff]
        %v1066 = vld [vmem:[%s1 + $0xf0] sm:$0xff]
        %v1067 = vld [vmem:[%s1 + $0xf8] sm:$0xff]
        %v1068 = vld [vmem:[%s1 + $0x100] sm:$0xff]
        %v1069 = vld [vmem:[%s1 + $0x108] sm:$0xff]
        %v1070 = vld [vmem:[%s1 + $0x110] sm:$0xff]
        %v1071 = vld [vmem:[%s1 + $0x118] sm:$0xff]
        %v1072 = vld [vmem:[%s1 + $0x120] sm:$0xff]
        %v1073 = vld [vmem:[%s1 + $0x128] sm:$0xff]
        %v1074 = vld [vmem:[%s1 + $0x130] sm:$0xff]
        %v1075 = vld [vmem:[%s1 + $0x138] sm:$0xff]
        %v1076 = vld [vmem:[%s1 + $0x140] sm:$0xff]
        %v1077 = vld [vmem:[%s1 + $0x148] sm:$0xff]
        %v1078 = vld [vmem:[%s1 + $0x150] sm:$0xff]
        %v1079 = vld [vmem:[%s1 + $0x158] sm:$0xff]
        %v1080 = vld [vmem:[%s1 + $0x160] sm:$0xff]
        %v1081 = vld [vmem:[%s1 + $0x168] sm:$0xff]
        %v1082 = vld [vmem:[%s1 + $0x170] sm:$0xff]
        %v1083 = vld [vmem:[%s1 + $0x178] sm:$0xff]
        %v1084 = vld [vmem:[%s1 + $0x180] sm:$0xff]
        %v1085 = vld [vmem:[%s1 + $0x188] sm:$0xff]
        %v1086 = vld [vmem:[%s1 + $0x190] sm:$0xff]
        %v1087 = vld [vmem:[%s1 + $0x198] sm:$0xff]
        %v1088 = vld [vmem:[%s1 + $0x1a0] sm:$0xff]
        %v1089 = vld [vmem:[%s1 + $0x1a8] sm:$0xff]
        %v1090 = vld [vmem:[%s1 + $0x1b0] sm:$0xff]
        %v1091 = vld [vmem:[%s1 + $0x1b8] sm:$0xff]
        %v1092 = vld [vmem:[%s1 + $0x1c0] sm:$0xff]
        %v1093 = vld [vmem:[%s1 + $0x1c8] sm:$0xff]
        %v1094 = vld [vmem:[%s1 + $0x1d0] sm:$0xff]
        %v1095 = vld [vmem:[%s1 + $0x1d8] sm:$0xff]
        %v1096 = vld [vmem:[%s1 + $0x1e0] sm:$0xff]
        %v1097 = vld [vmem:[%s1 + $0x1e8] sm:$0xff]
        %v1098 = vld [vmem:[%s1 + $0x1f0] sm:$0xff]
        %v1099 = vld [vmem:[%s1 + $0x1f8] sm:$0xff]
        %v1100 = vld [vmem:[%s2] sm:$0x1]
        %v1102 = vlaneseq
        %v1103 = vshrl.u32 %v1102, 7
        %v1104 = vsub.s32 0, %v1103
        %v1105 = vrot.slane %v1100, %v1104
        %1107 = vmatprep.subr.mxu0 0.0
        %1108 = vmatpush1.msra.mxu0 %v1036
        %1109 = vmatprep.subr.mxu0 0.0
        %1110 = vmatpush1.msra.mxu0 %v1037
        %1111 = vmatprep.subr.mxu0 0.0
        %1112 = vmatpush1.msra.mxu0 %v1038
        %1113 = vmatprep.subr.mxu0 0.0
        %1114 = vmatpush1.msra.mxu0 %v1039
        %1115 = vmatprep.subr.mxu0 0.0
        %1116 = vmatpush1.msra.mxu0 %v1040
        %1117 = vmatprep.subr.mxu0 0.0
        %1118 = vmatpush1.msra.mxu0 %v1041
        %1119 = vmatprep.subr.mxu0 0.0
        %1120 = vmatpush1.msra.mxu0 %v1042
        %1121 = vmatprep.subr.mxu0 0.0
        %1122 = vmatpush1.msra.mxu0 %v1043
        %1123 = vmatprep.subr.mxu0 0.0
        %1124 = vmatpush1.msra.mxu0 %v1044
        %1125 = vmatprep.subr.mxu0 0.0
        %1126 = vmatpush1.msra.mxu0 %v1045
        %1127 = vmatprep.subr.mxu0 0.0
        %1128 = vmatpush1.msra.mxu0 %v1046
        %1129 = vmatprep.subr.mxu0 0.0
        %1130 = vmatpush1.msra.mxu0 %v1047
        %1131 = vmatprep.subr.mxu0 0.0
        %1132 = vmatpush1.msra.mxu0 %v1048
        %1133 = vmatprep.subr.mxu0 0.0
        %1134 = vmatpush1.msra.mxu0 %v1049
        %1135 = vmatprep.subr.mxu0 0.0
        %1136 = vmatpush1.msra.mxu0 %v1050
        %1137 = vmatprep.subr.mxu0 0.0
        %1138 = vmatpush1.msra.mxu0 %v1051
        %1139 = vmatprep.subr.mxu0 0.0
        %1140 = vmatpush1.msra.mxu0 %v1052
        %1141 = vmatprep.subr.mxu0 0.0
        %1142 = vmatpush1.msra.mxu0 %v1053
        %1143 = vmatprep.subr.mxu0 0.0
        %1144 = vmatpush1.msra.mxu0 %v1054
        %1145 = vmatprep.subr.mxu0 0.0
        %1146 = vmatpush1.msra.mxu0 %v1055
        %1147 = vmatprep.subr.mxu0 0.0
        %1148 = vmatpush1.msra.mxu0 %v1056
        %1149 = vmatprep.subr.mxu0 0.0
        %1150 = vmatpush1.msra.mxu0 %v1057
        %1151 = vmatprep.subr.mxu0 0.0
        %1152 = vmatpush1.msra.mxu0 %v1058
        %1153 = vmatprep.subr.mxu0 0.0
        %1154 = vmatpush1.msra.mxu0 %v1059
        %1155 = vmatprep.subr.mxu0 0.0
        %1156 = vmatpush1.msra.mxu0 %v1060
        %1157 = vmatprep.subr.mxu0 0.0
        %1158 = vmatpush1.msra.mxu0 %v1061
        %1159 = vmatprep.subr.mxu0 0.0
        %1160 = vmatpush1.msra.mxu0 %v1062
        %1161 = vmatprep.subr.mxu0 0.0
        %1162 = vmatpush1.msra.mxu0 %v1063
        %1163 = vmatprep.subr.mxu0 0.0
        %1164 = vmatpush1.msra.mxu0 %v1064
        %1165 = vmatprep.subr.mxu0 0.0
        %1166 = vmatpush1.msra.mxu0 %v1065
        %1167 = vmatprep.subr.mxu0 0.0
        %1168 = vmatpush1.msra.mxu0 %v1066
        %1169 = vmatprep.subr.mxu0 0.0
        %1170 = vmatpush1.msra.mxu0 %v1067
        %1171 = vmatprep.mubr.f32.mxu0 %v572
        %1172 = vmatmul.mubr.f32.gmra.mrb[0].mxu0 %v540
        %v1173 = vpop.f32.mrb[0].mxu0
        %v1174 = vadd.f32 %v1105, %v1173
        %v1175 = vpop.f32.mrb[0].mxu0
        %1176 = vmatprep.mubr.f32.mxu0 %v573
        %1177 = vmatmul.mubr.f32.gmra.mrb[0].mxu0 %v541
        %v1178 = vpop.f32.mrb[0].mxu0
        %v1179 = vadd.f32 %v1105, %v1178
        %v1180 = vpop.f32.mrb[0].mxu0
        %1181 = vmatprep.mubr.f32.mxu0 %v574
        %1182 = vmatmul.mubr.f32.gmra.mrb[0].mxu0 %v542
        %v1183 = vpop.f32.mrb[0].mxu0
        %v1184 = vadd.f32 %v1105, %v1183
        %v1185 = vpop.f32.mrb[0].mxu0
        %1186 = vmatprep.mubr.f32.mxu0 %v575
        %1187 = vmatmul.mubr.f32.gmra.mrb[0].mxu0 %v543
        %v1188 = vpop.f32.mrb[0].mxu0
        %v1189 = vadd.f32 %v1105, %v1188
        %v1190 = vpop.f32.mrb[0].mxu0
        %1191 = vmatprep.mubr.f32.mxu0 %v576
        %1192 = vmatmul.mubr.f32.gmra.mrb[0].mxu0 %v544
        %v1193 = vpop.f32.mrb[0].mxu0
        %v1194 = vadd.f32 %v1105, %v1193
        %v1195 = vpop.f32.mrb[0].mxu0
        %1196 = vmatprep.mubr.f32.mxu0 %v577
        %1197 = vmatmul.mubr.f32.gmra.mrb[0].mxu0 %v545
        %v1198 = vpop.f32.mrb[0].mxu0
        %v1199 = vadd.f32 %v1105, %v1198
        %v1200 = vpop.f32.mrb[0].mxu0
        %1201 = vmatprep.mubr.f32.mxu0 %v578
        %1202 = vmatmul.mubr.f32.gmra.mrb[0].mxu0 %v546
        %v1203 = vpop.f32.mrb[0].mxu0
        %v1204 = vadd.f32 %v1105, %v1203
        %v1205 = vpop.f32.mrb[0].mxu0
        %1206 = vmatprep.mubr.f32.mxu0 %v579
        %1207 = vmatmul.mubr.f32.gmra.mrb[0].mxu0 %v547
        %v1208 = vpop.f32.mrb[0].mxu0
        %v1209 = vadd.f32 %v1105, %v1208
        %v1210 = vpop.f32.mrb[0].mxu0
        %1211 = vmatprep.mubr.f32.mxu0 %v700
        %1212 = vmatmul.mubr.f32.gmra.mrb[0].mxu0 %v668
        %v1213 = vpop.f32.mrb[0].mxu0
        %v1214 = vadd.f32 %v1105, %v1213
        %v1215 = vpop.f32.mrb[0].mxu0
        %1216 = vmatprep.mubr.f32.mxu0 %v701
        %1217 = vmatmul.mubr.f32.gmra.mrb[0].mxu0 %v669
        %v1218 = vpop.f32.mrb[0].mxu0
        %v1219 = vadd.f32 %v1105, %v1218
        %v1220 = vpop.f32.mrb[0].mxu0
        %1221 = vmatprep.mubr.f32.mxu0 %v702
        %1222 = vmatmul.mubr.f32.gmra.mrb[0].mxu0 %v670
        %v1223 = vpop.f32.mrb[0].mxu0
        %v1224 = vadd.f32 %v1105, %v1223
        %v1225 = vpop.f32.mrb[0].mxu0
        %1226 = vmatprep.mubr.f32.mxu0 %v703
        %1227 = vmatmul.mubr.f32.gmra.mrb[0].mxu0 %v671
        %v1228 = vpop.f32.mrb[0].mxu0
        %v1229 = vadd.f32 %v1105, %v1228
        %v1230 = vpop.f32.mrb[0].mxu0
        %1231 = vmatprep.mubr.f32.mxu0 %v704
        %1232 = vmatmul.mubr.f32.gmra.mrb[0].mxu0 %v672
        %v1233 = vpop.f32.mrb[0].mxu0
        %v1234 = vadd.f32 %v1105, %v1233
        %v1235 = vpop.f32.mrb[0].mxu0
        %1236 = vmatprep.mubr.f32.mxu0 %v705
        %1237 = vmatmul.mubr.f32.gmra.mrb[0].mxu0 %v673
        %v1238 = vpop.f32.mrb[0].mxu0
        %v1239 = vadd.f32 %v1105, %v1238
        %v1240 = vpop.f32.mrb[0].mxu0
        %1241 = vmatprep.mubr.f32.mxu0 %v706
        %1242 = vmatmul.mubr.f32.gmra.mrb[0].mxu0 %v674
        %v1243 = vpop.f32.mrb[0].mxu0
        %v1244 = vadd.f32 %v1105, %v1243
        %v1245 = vpop.f32.mrb[0].mxu0
        %1246 = vmatprep.mubr.f32.mxu0 %v707
        %1247 = vmatmul.mubr.f32.gmra.mrb[0].mxu0 %v675
        %v1248 = vpop.f32.mrb[0].mxu0
        %v1249 = vadd.f32 %v1105, %v1248
        %v1250 = vpop.f32.mrb[0].mxu0
        %1251 = vmatprep.mubr.f32.mxu0 %v828
        %1252 = vmatmul.mubr.f32.gmra.mrb[0].mxu0 %v796
        %v1253 = vpop.f32.mrb[0].mxu0
        %v1254 = vadd.f32 %v1105, %v1253
        %v1255 = vpop.f32.mrb[0].mxu0
        %1256 = vmatprep.mubr.f32.mxu0 %v829
        %1257 = vmatmul.mubr.f32.gmra.mrb[0].mxu0 %v797
        %v1258 = vpop.f32.mrb[0].mxu0
        %v1259 = vadd.f32 %v1105, %v1258
        %v1260 = vpop.f32.mrb[0].mxu0
        %1261 = vmatprep.mubr.f32.mxu0 %v830
        %1262 = vmatmul.mubr.f32.gmra.mrb[0].mxu0 %v798
        %v1263 = vpop.f32.mrb[0].mxu0
        %v1264 = vadd.f32 %v1105, %v1263
        %v1265 = vpop.f32.mrb[0].mxu0
        %1266 = vmatprep.mubr.f32.mxu0 %v831
        %1267 = vmatmul.mubr.f32.gmra.mrb[0].mxu0 %v799
        %v1268 = vpop.f32.mrb[0].mxu0
        %v1269 = vadd.f32 %v1105, %v1268
        %v1270 = vpop.f32.mrb[0].mxu0
        %1271 = vmatprep.mubr.f32.mxu0 %v832
        %1272 = vmatmul.mubr.f32.gmra.mrb[0].mxu0 %v800
        %v1273 = vpop.f32.mrb[0].mxu0
        %v1274 = vadd.f32 %v1105, %v1273
        %v1275 = vpop.f32.mrb[0].mxu0
        %1276 = vmatprep.mubr.f32.mxu0 %v833
        %1277 = vmatmul.mubr.f32.gmra.mrb[0].mxu0 %v801
        %v1278 = vpop.f32.mrb[0].mxu0
        %v1279 = vadd.f32 %v1105, %v1278
        %v1280 = vpop.f32.mrb[0].mxu0
        %1281 = vmatprep.mubr.f32.mxu0 %v834
        %1282 = vmatmul.mubr.f32.gmra.mrb[0].mxu0 %v802
        %v1283 = vpop.f32.mrb[0].mxu0
        %v1284 = vadd.f32 %v1105, %v1283
        %v1285 = vpop.f32.mrb[0].mxu0
        %1286 = vmatprep.mubr.f32.mxu0 %v835
        %1287 = vmatmul.mubr.f32.gmra.mrb[0].mxu0 %v803
        %v1288 = vpop.f32.mrb[0].mxu0
        %v1289 = vadd.f32 %v1105, %v1288
        %v1290 = vpop.f32.mrb[0].mxu0
        %1291 = vmatprep.mubr.f32.mxu0 %v956
        %1292 = vmatmul.mubr.f32.gmra.mrb[0].mxu0 %v924
        %v1293 = vpop.f32.mrb[0].mxu0
        %v1294 = vadd.f32 %v1105, %v1293
        %v1295 = vpop.f32.mrb[0].mxu0
        %1296 = vmatprep.mubr.f32.mxu0 %v957
        %1297 = vmatmul.mubr.f32.gmra.mrb[0].mxu0 %v925
        %v1298 = vpop.f32.mrb[0].mxu0
        %v1299 = vadd.f32 %v1105, %v1298
        %v1300 = vpop.f32.mrb[0].mxu0
        %1301 = vmatprep.mubr.f32.mxu0 %v958
        %1302 = vmatmul.mubr.f32.gmra.mrb[0].mxu0 %v926
        %v1303 = vpop.f32.mrb[0].mxu0
        %v1304 = vadd.f32 %v1105, %v1303
        %v1305 = vpop.f32.mrb[0].mxu0
        %1306 = vmatprep.mubr.f32.mxu0 %v959
        %1307 = vmatmul.mubr.f32.gmra.mrb[0].mxu0 %v927
        %v1308 = vpop.f32.mrb[0].mxu0
        %v1309 = vadd.f32 %v1105, %v1308
        %v1310 = vpop.f32.mrb[0].mxu0
        %1311 = vmatprep.mubr.f32.mxu0 %v960
        %1312 = vmatmul.mubr.f32.gmra.mrb[0].mxu0 %v928
        %v1313 = vpop.f32.mrb[0].mxu0
        %v1314 = vadd.f32 %v1105, %v1313
        %v1315 = vpop.f32.mrb[0].mxu0
        %1316 = vmatprep.mubr.f32.mxu0 %v961
        %1317 = vmatmul.mubr.f32.gmra.mrb[0].mxu0 %v929
        %v1318 = vpop.f32.mrb[0].mxu0
        %v1319 = vadd.f32 %v1105, %v1318
        %v1320 = vpop.f32.mrb[0].mxu0
        %1321 = vmatprep.mubr.f32.mxu0 %v962
        %1322 = vmatmul.mubr.f32.gmra.mrb[0].mxu0 %v930
        %v1323 = vpop.f32.mrb[0].mxu0
        %v1324 = vadd.f32 %v1105, %v1323
        %v1325 = vpop.f32.mrb[0].mxu0
        %1326 = vmatprep.mubr.f32.mxu0 %v963
        %1327 = vmatmul.mubr.f32.gmra.mrb[0].mxu0 %v931
        %v1328 = vpop.f32.mrb[0].mxu0
        %v1329 = vadd.f32 %v1105, %v1328
        %v1330 = vpop.f32.mrb[0].mxu0
        %1331 = vdwg.mxu0
        %1332 = vmatprep.subr.mxu0 0.0
        %1333 = vmatpush1.msra.mxu0 %v1068
        %1334 = vmatprep.subr.mxu0 0.0
        %1335 = vmatpush1.msra.mxu0 %v1069
        %1336 = vmatprep.subr.mxu0 0.0
        %1337 = vmatpush1.msra.mxu0 %v1070
        %1338 = vmatprep.subr.mxu0 0.0
        %1339 = vmatpush1.msra.mxu0 %v1071
        %1340 = vmatprep.subr.mxu0 0.0
        %1341 = vmatpush1.msra.mxu0 %v1072
        %1342 = vmatprep.subr.mxu0 0.0
        %1343 = vmatpush1.msra.mxu0 %v1073
        %1344 = vmatprep.subr.mxu0 0.0
        %1345 = vmatpush1.msra.mxu0 %v1074
        %1346 = vmatprep.subr.mxu0 0.0
        %1347 = vmatpush1.msra.mxu0 %v1075
        %1348 = vmatprep.subr.mxu0 0.0
        %1349 = vmatpush1.msra.mxu0 %v1076
        %1350 = vmatprep.subr.mxu0 0.0
        %1351 = vmatpush1.msra.mxu0 %v1077
        %1352 = vmatprep.subr.mxu0 0.0
        %1353 = vmatpush1.msra.mxu0 %v1078
        %1354 = vmatprep.subr.mxu0 0.0
        %1355 = vmatpush1.msra.mxu0 %v1079
        %1356 = vmatprep.subr.mxu0 0.0
        %1357 = vmatpush1.msra.mxu0 %v1080
        %1358 = vmatprep.subr.mxu0 0.0
        %1359 = vmatpush1.msra.mxu0 %v1081
        %1360 = vmatprep.subr.mxu0 0.0
        %1361 = vmatpush1.msra.mxu0 %v1082
        %1362 = vmatprep.subr.mxu0 0.0
        %1363 = vmatpush1.msra.mxu0 %v1083
        %1364 = vmatprep.subr.mxu0 0.0
        %1365 = vmatpush1.msra.mxu0 %v1084
        %1366 = vmatprep.subr.mxu0 0.0
        %1367 = vmatpush1.msra.mxu0 %v1085
        %1368 = vmatprep.subr.mxu0 0.0
        %1369 = vmatpush1.msra.mxu0 %v1086
        %1370 = vmatprep.subr.mxu0 0.0
        %1371 = vmatpush1.msra.mxu0 %v1087
        %1372 = vmatprep.subr.mxu0 0.0
        %1373 = vmatpush1.msra.mxu0 %v1088
        %1374 = vmatprep.subr.mxu0 0.0
        %1375 = vmatpush1.msra.mxu0 %v1089
        %1376 = vmatprep.subr.mxu0 0.0
        %1377 = vmatpush1.msra.mxu0 %v1090
        %1378 = vmatprep.subr.mxu0 0.0
        %1379 = vmatpush1.msra.mxu0 %v1091
        %1380 = vmatprep.subr.mxu0 0.0
        %1381 = vmatpush1.msra.mxu0 %v1092
        %1382 = vmatprep.subr.mxu0 0.0
        %1383 = vmatpush1.msra.mxu0 %v1093
        %1384 = vmatprep.subr.mxu0 0.0
        %1385 = vmatpush1.msra.mxu0 %v1094
        %1386 = vmatprep.subr.mxu0 0.0
        %1387 = vmatpush1.msra.mxu0 %v1095
        %1388 = vmatprep.subr.mxu0 0.0
        %1389 = vmatpush1.msra.mxu0 %v1096
        %1390 = vmatprep.subr.mxu0 0.0
        %1391 = vmatpush1.msra.mxu0 %v1097
        %1392 = vmatprep.subr.mxu0 0.0
        %1393 = vmatpush1.msra.mxu0 %v1098
        %1394 = vmatprep.subr.mxu0 0.0
        %1395 = vmatpush1.msra.mxu0 %v1099
        %1396 = vmatprep.mubr.f32.mxu0 %v636
        %1397 = vmatmul.mubr.f32.gmra.mrb[0].mxu0 %v604
        %v1398 = vpop.f32.mrb[0].mxu0
        %v1399 = vadd.f32 %v1174, %v1398
        %v1400 = vpop.f32.mrb[0].mxu0
        %1401 = vmatprep.mubr.f32.mxu0 %v637
        %1402 = vmatmul.mubr.f32.gmra.mrb[0].mxu0 %v605
        %v1403 = vpop.f32.mrb[0].mxu0
        %v1404 = vadd.f32 %v1179, %v1403
        %v1405 = vpop.f32.mrb[0].mxu0
        %1406 = vmatprep.mubr.f32.mxu0 %v638
        %1407 = vmatmul.mubr.f32.gmra.mrb[0].mxu0 %v606
        %v1408 = vpop.f32.mrb[0].mxu0
        %v1409 = vadd.f32 %v1184, %v1408
        %v1410 = vpop.f32.mrb[0].mxu0
        %1411 = vmatprep.mubr.f32.mxu0 %v639
        %1412 = vmatmul.mubr.f32.gmra.mrb[0].mxu0 %v607
        %v1413 = vpop.f32.mrb[0].mxu0
        %v1414 = vadd.f32 %v1189, %v1413
        %v1415 = vpop.f32.mrb[0].mxu0
        %1416 = vmatprep.mubr.f32.mxu0 %v640
        %1417 = vmatmul.mubr.f32.gmra.mrb[0].mxu0 %v608
        %v1418 = vpop.f32.mrb[0].mxu0
        %v1419 = vadd.f32 %v1194, %v1418
        %v1420 = vpop.f32.mrb[0].mxu0
        %1421 = vmatprep.mubr.f32.mxu0 %v641
        %1422 = vmatmul.mubr.f32.gmra.mrb[0].mxu0 %v609
        %v1423 = vpop.f32.mrb[0].mxu0
        %v1424 = vadd.f32 %v1199, %v1423
        %v1425 = vpop.f32.mrb[0].mxu0
        %1426 = vmatprep.mubr.f32.mxu0 %v642
        %1427 = vmatmul.mubr.f32.gmra.mrb[0].mxu0 %v610
        %v1428 = vpop.f32.mrb[0].mxu0
        %v1429 = vadd.f32 %v1204, %v1428
        %v1430 = vpop.f32.mrb[0].mxu0
        %1431 = vmatprep.mubr.f32.mxu0 %v643
        %1432 = vmatmul.mubr.f32.gmra.mrb[0].mxu0 %v611
        %v1433 = vpop.f32.mrb[0].mxu0
        %v1434 = vadd.f32 %v1209, %v1433
        %v1435 = vpop.f32.mrb[0].mxu0
        %1436 = vmatprep.mubr.f32.mxu0 %v764
        %1437 = vmatmul.mubr.f32.gmra.mrb[0].mxu0 %v732
        %v1438 = vpop.f32.mrb[0].mxu0
        %v1439 = vadd.f32 %v1214, %v1438
        %v1440 = vpop.f32.mrb[0].mxu0
        %1441 = vmatprep.mubr.f32.mxu0 %v765
        %1442 = vmatmul.mubr.f32.gmra.mrb[0].mxu0 %v733
        %v1443 = vpop.f32.mrb[0].mxu0
        %v1444 = vadd.f32 %v1219, %v1443
        %v1445 = vpop.f32.mrb[0].mxu0
        %1446 = vmatprep.mubr.f32.mxu0 %v766
        %1447 = vmatmul.mubr.f32.gmra.mrb[0].mxu0 %v734
        %v1448 = vpop.f32.mrb[0].mxu0
        %v1449 = vadd.f32 %v1224, %v1448
        %v1450 = vpop.f32.mrb[0].mxu0
        %1451 = vmatprep.mubr.f32.mxu0 %v767
        %1452 = vmatmul.mubr.f32.gmra.mrb[0].mxu0 %v735
        %v1453 = vpop.f32.mrb[0].mxu0
        %v1454 = vadd.f32 %v1229, %v1453
        %v1455 = vpop.f32.mrb[0].mxu0
        %1456 = vmatprep.mubr.f32.mxu0 %v768
        %1457 = vmatmul.mubr.f32.gmra.mrb[0].mxu0 %v736
        %v1458 = vpop.f32.mrb[0].mxu0
        %v1459 = vadd.f32 %v1234, %v1458
        %v1460 = vpop.f32.mrb[0].mxu0
        %1461 = vmatprep.mubr.f32.mxu0 %v769
        %1462 = vmatmul.mubr.f32.gmra.mrb[0].mxu0 %v737
        %v1463 = vpop.f32.mrb[0].mxu0
        %v1464 = vadd.f32 %v1239, %v1463
        %v1465 = vpop.f32.mrb[0].mxu0
        %1466 = vmatprep.mubr.f32.mxu0 %v770
        %1467 = vmatmul.mubr.f32.gmra.mrb[0].mxu0 %v738
        %v1468 = vpop.f32.mrb[0].mxu0
        %v1469 = vadd.f32 %v1244, %v1468
        %v1470 = vpop.f32.mrb[0].mxu0
        %1471 = vmatprep.mubr.f32.mxu0 %v771
        %1472 = vmatmul.mubr.f32.gmra.mrb[0].mxu0 %v739
        %v1473 = vpop.f32.mrb[0].mxu0
        %v1474 = vadd.f32 %v1249, %v1473
        %v1475 = vpop.f32.mrb[0].mxu0
        %1476 = vmatprep.mubr.f32.mxu0 %v892
        %1477 = vmatmul.mubr.f32.gmra.mrb[0].mxu0 %v860
        %v1478 = vpop.f32.mrb[0].mxu0
        %v1479 = vadd.f32 %v1254, %v1478
        %v1480 = vpop.f32.mrb[0].mxu0
        %1481 = vmatprep.mubr.f32.mxu0 %v893
        %1482 = vmatmul.mubr.f32.gmra.mrb[0].mxu0 %v861
        %v1483 = vpop.f32.mrb[0].mxu0
        %v1484 = vadd.f32 %v1259, %v1483
        %v1485 = vpop.f32.mrb[0].mxu0
        %1486 = vmatprep.mubr.f32.mxu0 %v894
        %1487 = vmatmul.mubr.f32.gmra.mrb[0].mxu0 %v862
        %v1488 = vpop.f32.mrb[0].mxu0
        %v1489 = vadd.f32 %v1264, %v1488
        %v1490 = vpop.f32.mrb[0].mxu0
        %1491 = vmatprep.mubr.f32.mxu0 %v895
        %1492 = vmatmul.mubr.f32.gmra.mrb[0].mxu0 %v863
        %v1493 = vpop.f32.mrb[0].mxu0
        %v1494 = vadd.f32 %v1269, %v1493
        %v1495 = vpop.f32.mrb[0].mxu0
        %1496 = vmatprep.mubr.f32.mxu0 %v896
        %1497 = vmatmul.mubr.f32.gmra.mrb[0].mxu0 %v864
        %v1498 = vpop.f32.mrb[0].mxu0
        %v1499 = vadd.f32 %v1274, %v1498
        %v1500 = vpop.f32.mrb[0].mxu0
        %1501 = vmatprep.mubr.f32.mxu0 %v897
        %1502 = vmatmul.mubr.f32.gmra.mrb[0].mxu0 %v865
        %v1503 = vpop.f32.mrb[0].mxu0
        %v1504 = vadd.f32 %v1279, %v1503
        %v1505 = vpop.f32.mrb[0].mxu0
        %1506 = vmatprep.mubr.f32.mxu0 %v898
        %1507 = vmatmul.mubr.f32.gmra.mrb[0].mxu0 %v866
        %v1508 = vpop.f32.mrb[0].mxu0
        %v1509 = vadd.f32 %v1284, %v1508
        %v1510 = vpop.f32.mrb[0].mxu0
        %1511 = vmatprep.mubr.f32.mxu0 %v899
        %1512 = vmatmul.mubr.f32.gmra.mrb[0].mxu0 %v867
        %v1513 = vpop.f32.mrb[0].mxu0
        %v1514 = vadd.f32 %v1289, %v1513
        %v1515 = vpop.f32.mrb[0].mxu0
        %1516 = vmatprep.mubr.f32.mxu0 %v1020
        %1517 = vmatmul.mubr.f32.gmra.mrb[0].mxu0 %v988
        %v1518 = vpop.f32.mrb[0].mxu0
        %v1519 = vadd.f32 %v1294, %v1518
        %v1520 = vpop.f32.mrb[0].mxu0
        %1521 = vmatprep.mubr.f32.mxu0 %v1021
        %1522 = vmatmul.mubr.f32.gmra.mrb[0].mxu0 %v989
        %v1523 = vpop.f32.mrb[0].mxu0
        %v1524 = vadd.f32 %v1299, %v1523
        %v1525 = vpop.f32.mrb[0].mxu0
        %1526 = vmatprep.mubr.f32.mxu0 %v1022
        %1527 = vmatmul.mubr.f32.gmra.mrb[0].mxu0 %v990
        %v1528 = vpop.f32.mrb[0].mxu0
        %v1529 = vadd.f32 %v1304, %v1528
        %v1530 = vpop.f32.mrb[0].mxu0
        %1531 = vmatprep.mubr.f32.mxu0 %v1023
        %1532 = vmatmul.mubr.f32.gmra.mrb[0].mxu0 %v991
        %v1533 = vpop.f32.mrb[0].mxu0
        %v1534 = vadd.f32 %v1309, %v1533
        %v1535 = vpop.f32.mrb[0].mxu0
        %1536 = vmatprep.mubr.f32.mxu0 %v1024
        %1537 = vmatmul.mubr.f32.gmra.mrb[0].mxu0 %v992
        %v1538 = vpop.f32.mrb[0].mxu0
        %v1539 = vadd.f32 %v1314, %v1538
        %v1540 = vpop.f32.mrb[0].mxu0
        %1541 = vmatprep.mubr.f32.mxu0 %v1025
        %1542 = vmatmul.mubr.f32.gmra.mrb[0].mxu0 %v993
        %v1543 = vpop.f32.mrb[0].mxu0
        %v1544 = vadd.f32 %v1319, %v1543
        %v1545 = vpop.f32.mrb[0].mxu0
        %1546 = vmatprep.mubr.f32.mxu0 %v1026
        %1547 = vmatmul.mubr.f32.gmra.mrb[0].mxu0 %v994
        %v1548 = vpop.f32.mrb[0].mxu0
        %v1549 = vadd.f32 %v1324, %v1548
        %v1550 = vpop.f32.mrb[0].mxu0
        %1551 = vmatprep.mubr.f32.mxu0 %v1027
        %1552 = vmatmul.mubr.f32.gmra.mrb[0].mxu0 %v995
        %v1553 = vpop.f32.mrb[0].mxu0
        %v1554 = vadd.f32 %v1329, %v1553
        %v1555 = vpop.f32.mrb[0].mxu0
        %1556 = vdwg.mxu0
        %vm1557 = vcmask 261120
        %v1558 = vsel %vm1557, %v1399, -inf
        %v1559 = vsel %vm1557, %v1404, -inf
        %v1560 = vmax.f32 %v1558, %v1559
        %v1561 = vsel %vm1557, %v1409, -inf
        %v1562 = vmax.f32 %v1560, %v1561
        %v1563 = vsel %vm1557, %v1414, -inf
        %v1564 = vmax.f32 %v1562, %v1563
        %v1565 = vsel %vm1557, %v1419, -inf
        %v1566 = vmax.f32 %v1564, %v1565
        %v1567 = vsel %vm1557, %v1424, -inf
        %v1568 = vmax.f32 %v1566, %v1567
        %v1569 = vsel %vm1557, %v1429, -inf
        %v1570 = vmax.f32 %v1568, %v1569
        %v1571 = vsel %vm1557, %v1434, -inf
        %v1572 = vmax.f32 %v1570, %v1571
        %v1573 = vrot.slane %v1572, 4
        %v1574 = vmax.f32 %v1572, %v1573
        %v1575 = vrot.slane %v1574, 2
        %v1576 = vmax.f32 %v1574, %v1575
        %v1577 = vrot.slane %v1576, 1
        %v1578 = vmax.f32 %v1576, %v1577
        %v1579 = vsel %vm1557, %v1439, -inf
        %v1580 = vsel %vm1557, %v1444, -inf
        %v1581 = vmax.f32 %v1579, %v1580
        %v1582 = vsel %vm1557, %v1449, -inf
        %v1583 = vmax.f32 %v1581, %v1582
        %v1584 = vsel %vm1557, %v1454, -inf
        %v1585 = vmax.f32 %v1583, %v1584
        %v1586 = vsel %vm1557, %v1459, -inf
        %v1587 = vmax.f32 %v1585, %v1586
        %v1588 = vsel %vm1557, %v1464, -inf
        %v1589 = vmax.f32 %v1587, %v1588
        %v1590 = vsel %vm1557, %v1469, -inf
        %v1591 = vmax.f32 %v1589, %v1590
        %v1592 = vsel %vm1557, %v1474, -inf
        %v1593 = vmax.f32 %v1591, %v1592
        %v1594 = vrot.slane %v1593, 4
        %v1595 = vmax.f32 %v1593, %v1594
        %v1596 = vrot.slane %v1595, 2
        %v1597 = vmax.f32 %v1595, %v1596
        %v1598 = vrot.slane %v1597, 1
        %v1599 = vmax.f32 %v1597, %v1598
        %v1600 = vsel %vm1557, %v1479, -inf
        %v1601 = vsel %vm1557, %v1484, -inf
        %v1602 = vmax.f32 %v1600, %v1601
        %v1603 = vsel %vm1557, %v1489, -inf
        %v1604 = vmax.f32 %v1602, %v1603
        %v1605 = vsel %vm1557, %v1494, -inf
        %v1606 = vmax.f32 %v1604, %v1605
        %v1607 = vsel %vm1557, %v1499, -inf
        %v1608 = vmax.f32 %v1606, %v1607
        %v1609 = vsel %vm1557, %v1504, -inf
        %v1610 = vmax.f32 %v1608, %v1609
        %v1611 = vsel %vm1557, %v1509, -inf
        %v1612 = vmax.f32 %v1610, %v1611
        %v1613 = vsel %vm1557, %v1514, -inf
        %v1614 = vmax.f32 %v1612, %v1613
        %v1615 = vrot.slane %v1614, 4
        %v1616 = vmax.f32 %v1614, %v1615
        %v1617 = vrot.slane %v1616, 2
        %v1618 = vmax.f32 %v1616, %v1617
        %v1619 = vrot.slane %v1618, 1
        %v1620 = vmax.f32 %v1618, %v1619
        %v1621 = vsel %vm1557, %v1519, -inf
        %v1622 = vsel %vm1557, %v1524, -inf
        %v1623 = vmax.f32 %v1621, %v1622
        %v1624 = vsel %vm1557, %v1529, -inf
        %v1625 = vmax.f32 %v1623, %v1624
        %v1626 = vsel %vm1557, %v1534, -inf
        %v1627 = vmax.f32 %v1625, %v1626
        %v1628 = vsel %vm1557, %v1539, -inf
        %v1629 = vmax.f32 %v1627, %v1628
        %v1630 = vsel %vm1557, %v1544, -inf
        %v1631 = vmax.f32 %v1629, %v1630
        %v1632 = vsel %vm1557, %v1549, -inf
        %v1633 = vmax.f32 %v1631, %v1632
        %v1634 = vsel %vm1557, %v1554, -inf
        %v1635 = vmax.f32 %v1633, %v1634
        %v1636 = vrot.slane %v1635, 4
        %v1637 = vmax.f32 %v1635, %v1636
        %v1638 = vrot.slane %v1637, 2
        %v1639 = vmax.f32 %v1637, %v1638
        %v1640 = vrot.slane %v1639, 1
        %v1641 = vmax.f32 %v1639, %v1640
        %v1642 = vld [vmem:[%s3] sm:$0xff]
        %v1643 = vld [vmem:[%s3 + $0x8] sm:$0xff]
        %v1644 = vld [vmem:[%s3 + $0x10] sm:$0xff]
        %v1645 = vld [vmem:[%s3 + $0x18] sm:$0xff]
        %vm1650 = vcmask 1041409
        %v1651 = vsel %vm1650, %v1599, %v1578
        %vm1652 = vcmask 1042434
        %v1653 = vsel %vm1652, %v1620, %v1651
        %vm1654 = vcmask 1043459
        %v1655 = vsel %vm1654, %v1641, %v1653
        %v1656 = vsel %vm1557, %v1655, 0
        %1658 = vmatprep.subr.mxu0 0.0
        %1659 = vmatpush1.msra.mxu0 %v1642
        %1660 = vmatprep.subr.mxu0 0.0
        %1661 = vmatpush1.msra.mxu0 %v1643
        %1662 = vmatprep.subr.mxu0 0.0
        %1663 = vmatpush1.msra.mxu0 %v1644
        %1664 = vmatprep.subr.mxu0 0.0
        %1665 = vmatpush1.msra.mxu0 %v1645
        %1666 = vmatprep.subr.mxu0 0.0
        %1667 = vmatpush1.msra.mxu0 0.0
        %1668 = vmatprep.subr.mxu0 0.0
        %1669 = vmatpush1.msra.mxu0 0.0
        %1670 = vmatprep.subr.mxu0 0.0
        %1671 = vmatpush1.msra.mxu0 0.0
        %1672 = vmatprep.subr.mxu0 0.0
        %1673 = vmatpush1.msra.mxu0 0.0
        %1674 = vmatprep.subr.mxu0 0.0
        %1675 = vmatpush1.msra.mxu0 0.0
        %1676 = vmatprep.subr.mxu0 0.0
        %1677 = vmatpush1.msra.mxu0 0.0
        %1678 = vmatprep.subr.mxu0 0.0
        %1679 = vmatpush1.msra.mxu0 0.0
        %1680 = vmatprep.subr.mxu0 0.0
        %1681 = vmatpush1.msra.mxu0 0.0
        %1682 = vmatprep.subr.mxu0 0.0
        %1683 = vmatpush1.msra.mxu0 0.0
        %1684 = vmatprep.subr.mxu0 0.0
        %1685 = vmatpush1.msra.mxu0 0.0
        %1686 = vmatprep.subr.mxu0 0.0
        %1687 = vmatpush1.msra.mxu0 0.0
        %1688 = vmatprep.subr.mxu0 0.0
        %1689 = vmatpush1.msra.mxu0 0.0
        %1690 = vmatprep.subr.mxu0 0.0
        %1691 = vmatpush1.msra.mxu0 0.0
        %1692 = vmatprep.subr.mxu0 0.0
        %1693 = vmatpush1.msra.mxu0 0.0
        %1694 = vmatprep.subr.mxu0 0.0
        %1695 = vmatpush1.msra.mxu0 0.0
        %1696 = vmatprep.subr.mxu0 0.0
        %1697 = vmatpush1.msra.mxu0 0.0
        %1698 = vmatprep.subr.mxu0 0.0
        %1699 = vmatpush1.msra.mxu0 0.0
        %1700 = vmatprep.subr.mxu0 0.0
        %1701 = vmatpush1.msra.mxu0 0.0
        %1702 = vmatprep.subr.mxu0 0.0
        %1703 = vmatpush1.msra.mxu0 0.0
        %1704 = vmatprep.subr.mxu0 0.0
        %1705 = vmatpush1.msra.mxu0 0.0
        %1706 = vmatprep.subr.mxu0 0.0
        %1707 = vmatpush1.msra.mxu0 0.0
        %1708 = vmatprep.subr.mxu0 0.0
        %1709 = vmatpush1.msra.mxu0 0.0
        %1710 = vmatprep.subr.mxu0 0.0
        %1711 = vmatpush1.msra.mxu0 0.0
        %1712 = vmatprep.subr.mxu0 0.0
        %1713 = vmatpush1.msra.mxu0 0.0
        %1714 = vmatprep.subr.mxu0 0.0
        %1715 = vmatpush1.msra.mxu0 0.0
        %1716 = vmatprep.subr.mxu0 0.0
        %1717 = vmatpush1.msra.mxu0 0.0
        %1718 = vmatprep.subr.mxu0 0.0
        %1719 = vmatpush1.msra.mxu0 0.0
        %1720 = vmatprep.subr.mxu0 0.0
        %1721 = vmatpush1.msra.mxu0 0.0
        %1722 = vmatprep.mubr.f32.mxu0 0.0
        %1723 = vmatmul.mubr.f32.gmra.mrb[0].mxu0 %v1656
        %v1724 = vpop.f32.mrb[0].mxu0
        %v1725 = vadd.f32 0.0, %v1724
        %v1726 = vpop.f32.mrb[0].mxu0
        %1727 = vdwg.mxu0
        %v1730 = vunpack.c.l.s4 1966171168
        %v1731 = vunpack.c.0.s8 %v1730
        %v1732 = vlaneseq
        %v1733 = vshrl.u32 %v1732, 7
        %v1734 = vsub.s32 %v1731, %v1733
        %v1735 = vrot.slane %v1725, %v1734
        %v1736 = vcombine.high %v1735, %v1735
        %v1738 = vunpack.c.l.s4 1966171168
        %v1739 = vunpack.c.0.s8 %v1738
        %v1740 = vlaneseq
        %v1741 = vshrl.u32 %v1740, 7
        %v1742 = vsub.s32 %v1739, %v1741
        %v1743 = vrot.slane %v1735, %v1742
        %v1745 = vunpack.c.l.s4 1966171168
        %v1746 = vunpack.c.0.s8 %v1745
        %v1747 = vlaneseq
        %v1748 = vshrl.u32 %v1747, 7
        %v1749 = vsub.s32 %v1746, %v1748
        %v1750 = vrot.slane %v1736, %v1749
        %v1751 = vcombine.high %v1743, %v1743
        %v1752 = vcombine.high %v1750, %v1750
        %v1757 = vlaneseq
        %v1758 = vshrl.u32 %v1757, 7
        %v1759 = vsub.s32 0, %v1758
        %v1760 = vrot.slane %v1743, %v1759
        %v1761 = vlaneseq
        %v1762 = vshrl.u32 %v1761, 7
        %v1763 = vsub.s32 0, %v1762
        %v1764 = vrot.slane %v1750, %v1763
        %v1765 = vlaneseq
        %v1766 = vshrl.u32 %v1765, 7
        %v1767 = vsub.s32 0, %v1766
        %v1768 = vrot.slane %v1751, %v1767
        %v1769 = vlaneseq
        %v1770 = vshrl.u32 %v1769, 7
        %v1771 = vsub.s32 0, %v1770
        %v1772 = vrot.slane %v1752, %v1771
        %1773 = vrot.lane.b32.xlu0 %v1760, 32
        %v1774 = vpop.permute.xlu0 %1773
        %1775 = vrot.lane.b32.xlu0 %v1764, 32
        %v1776 = vpop.permute.xlu0 %1775
        %1777 = vrot.lane.b32.xlu0 %v1768, 32
        %v1778 = vpop.permute.xlu0 %1777
        %1779 = vrot.lane.b32.xlu0 %v1772, 32
        %v1780 = vpop.permute.xlu0 %1779
        %v1785 = vmul.f32 %v1399, %v1774
        %v1786 = vmul.f32 %v1404, %v1774
        %v1787 = vmul.f32 %v1409, %v1774
        %v1788 = vmul.f32 %v1414, %v1774
        %v1789 = vmul.f32 %v1419, %v1774
        %v1790 = vmul.f32 %v1424, %v1774
        %v1791 = vmul.f32 %v1429, %v1774
        %v1792 = vmul.f32 %v1434, %v1774
        %v1793 = vmul.f32 %v1439, %v1776
        %v1794 = vmul.f32 %v1444, %v1776
        %v1795 = vmul.f32 %v1449, %v1776
        %v1796 = vmul.f32 %v1454, %v1776
        %v1797 = vmul.f32 %v1459, %v1776
        %v1798 = vmul.f32 %v1464, %v1776
        %v1799 = vmul.f32 %v1469, %v1776
        %v1800 = vmul.f32 %v1474, %v1776
        %v1801 = vmul.f32 %v1479, %v1778
        %v1802 = vmul.f32 %v1484, %v1778
        %v1803 = vmul.f32 %v1489, %v1778
        %v1804 = vmul.f32 %v1494, %v1778
        %v1805 = vmul.f32 %v1499, %v1778
        %v1806 = vmul.f32 %v1504, %v1778
        %v1807 = vmul.f32 %v1509, %v1778
        %v1808 = vmul.f32 %v1514, %v1778
        %v1809 = vmul.f32 %v1519, %v1780
        %v1810 = vmul.f32 %v1524, %v1780
        %v1811 = vmul.f32 %v1529, %v1780
        %v1812 = vmul.f32 %v1534, %v1780
        %v1813 = vmul.f32 %v1539, %v1780
        %v1814 = vmul.f32 %v1544, %v1780
        %v1815 = vmul.f32 %v1549, %v1780
        %v1816 = vmul.f32 %v1554, %v1780
        %1849 = vrot.lane.b32.xlu0 %v1785, 96
        %v1850 = vpop.permute.xlu0 %1849
        %1851 = vrot.lane.b32.xlu0 %v1786, 96
        %v1852 = vpop.permute.xlu0 %1851
        %1853 = vrot.lane.b32.xlu0 %v1787, 96
        %v1854 = vpop.permute.xlu0 %1853
        %1855 = vrot.lane.b32.xlu0 %v1788, 96
        %v1856 = vpop.permute.xlu0 %1855
        %1857 = vrot.lane.b32.xlu0 %v1789, 96
        %v1858 = vpop.permute.xlu0 %1857
        %1859 = vrot.lane.b32.xlu0 %v1790, 96
        %v1860 = vpop.permute.xlu0 %1859
        %1861 = vrot.lane.b32.xlu0 %v1791, 96
        %v1862 = vpop.permute.xlu0 %1861
        %1863 = vrot.lane.b32.xlu0 %v1792, 96
        %v1864 = vpop.permute.xlu0 %1863
        %1865 = vrot.lane.b32.xlu0 %v1793, 96
        %v1866 = vpop.permute.xlu0 %1865
        %1867 = vrot.lane.b32.xlu0 %v1794, 96
        %v1868 = vpop.permute.xlu0 %1867
        %1869 = vrot.lane.b32.xlu0 %v1795, 96
        %v1870 = vpop.permute.xlu0 %1869
        %1871 = vrot.lane.b32.xlu0 %v1796, 96
        %v1872 = vpop.permute.xlu0 %1871
        %1873 = vrot.lane.b32.xlu0 %v1797, 96
        %v1874 = vpop.permute.xlu0 %1873
        %1875 = vrot.lane.b32.xlu0 %v1798, 96
        %v1876 = vpop.permute.xlu0 %1875
        %1877 = vrot.lane.b32.xlu0 %v1799, 96
        %v1878 = vpop.permute.xlu0 %1877
        %1879 = vrot.lane.b32.xlu0 %v1800, 96
        %v1880 = vpop.permute.xlu0 %1879
        %1881 = vrot.lane.b32.xlu0 %v1801, 96
        %v1882 = vpop.permute.xlu0 %1881
        %1883 = vrot.lane.b32.xlu0 %v1802, 96
        %v1884 = vpop.permute.xlu0 %1883
        %1885 = vrot.lane.b32.xlu0 %v1803, 96
        %v1886 = vpop.permute.xlu0 %1885
        %1887 = vrot.lane.b32.xlu0 %v1804, 96
        %v1888 = vpop.permute.xlu0 %1887
        %1889 = vrot.lane.b32.xlu0 %v1805, 96
        %v1890 = vpop.permute.xlu0 %1889
        %1891 = vrot.lane.b32.xlu0 %v1806, 96
        %v1892 = vpop.permute.xlu0 %1891
        %1893 = vrot.lane.b32.xlu0 %v1807, 96
        %v1894 = vpop.permute.xlu0 %1893
        %1895 = vrot.lane.b32.xlu0 %v1808, 96
        %v1896 = vpop.permute.xlu0 %1895
        %1897 = vrot.lane.b32.xlu0 %v1809, 96
        %v1898 = vpop.permute.xlu0 %1897
        %1899 = vrot.lane.b32.xlu0 %v1810, 96
        %v1900 = vpop.permute.xlu0 %1899
        %1901 = vrot.lane.b32.xlu0 %v1811, 96
        %v1902 = vpop.permute.xlu0 %1901
        %1903 = vrot.lane.b32.xlu0 %v1812, 96
        %v1904 = vpop.permute.xlu0 %1903
        %1905 = vrot.lane.b32.xlu0 %v1813, 96
        %v1906 = vpop.permute.xlu0 %1905
        %1907 = vrot.lane.b32.xlu0 %v1814, 96
        %v1908 = vpop.permute.xlu0 %1907
        %1909 = vrot.lane.b32.xlu0 %v1815, 96
        %v1910 = vpop.permute.xlu0 %1909
        %1911 = vrot.lane.b32.xlu0 %v1816, 96
        %v1912 = vpop.permute.xlu0 %1911
        %1945 = vxpose.xlu0.b32.start [1/16] %v1850, 128
        %1946 = vxpose.xlu0.b32.cont [2/16] %v1852, 128
        %1947 = vxpose.xlu0.b32.cont [3/16] %v1854, 128
        %1948 = vxpose.xlu0.b32.cont [4/16] %v1856, 128
        %1949 = vxpose.xlu0.b32.cont [5/16] %v1858, 128
        %1950 = vxpose.xlu0.b32.cont [6/16] %v1860, 128
        %1951 = vxpose.xlu0.b32.cont [7/16] %v1862, 128
        %1952 = vxpose.xlu0.b32.cont [8/16] %v1864, 128
        %1953 = vxpose.xlu0.b32.cont [9/16] 0.0, 128
        %1954 = vxpose.xlu0.b32.cont [10/16] 0.0, 128
        %1955 = vxpose.xlu0.b32.cont [11/16] 0.0, 128
        %1956 = vxpose.xlu0.b32.cont [12/16] 0.0, 128
        %1957 = vxpose.xlu0.b32.cont [13/16] 0.0, 128
        %1958 = vxpose.xlu0.b32.cont [14/16] 0.0, 128
        %1959 = vxpose.xlu0.b32.cont [15/16] 0.0, 128
        %1960 = vxpose.xlu0.b32.end [16/16] 0.0, 128
        %v1961 = vpop.trf.xlu0
        %v1962 = vpop.trf.xlu0
        %v1963 = vpop.trf.xlu0
        %v1964 = vpop.trf.xlu0
        %v1965 = vpop.trf.xlu0
        %v1966 = vpop.trf.xlu0
        %v1967 = vpop.trf.xlu0
        %v1968 = vpop.trf.xlu0
        %v1969 = vpop.trf.xlu0
        %v1970 = vpop.trf.xlu0
        %v1971 = vpop.trf.xlu0
        %v1972 = vpop.trf.xlu0
        %v1973 = vpop.trf.xlu0
        %v1974 = vpop.trf.xlu0
        %v1975 = vpop.trf.xlu0
        %v1976 = vpop.trf.xlu0
        %1977 = vxpose.xlu0.b32.start [1/16] %v1866, 128
        %1978 = vxpose.xlu0.b32.cont [2/16] %v1868, 128
        %1979 = vxpose.xlu0.b32.cont [3/16] %v1870, 128
        %1980 = vxpose.xlu0.b32.cont [4/16] %v1872, 128
        %1981 = vxpose.xlu0.b32.cont [5/16] %v1874, 128
        %1982 = vxpose.xlu0.b32.cont [6/16] %v1876, 128
        %1983 = vxpose.xlu0.b32.cont [7/16] %v1878, 128
        %1984 = vxpose.xlu0.b32.cont [8/16] %v1880, 128
        %1985 = vxpose.xlu0.b32.cont [9/16] 0.0, 128
        %1986 = vxpose.xlu0.b32.cont [10/16] 0.0, 128
        %1987 = vxpose.xlu0.b32.cont [11/16] 0.0, 128
        %1988 = vxpose.xlu0.b32.cont [12/16] 0.0, 128
        %1989 = vxpose.xlu0.b32.cont [13/16] 0.0, 128
        %1990 = vxpose.xlu0.b32.cont [14/16] 0.0, 128
        %1991 = vxpose.xlu0.b32.cont [15/16] 0.0, 128
        %1992 = vxpose.xlu0.b32.end [16/16] 0.0, 128
        %v1993 = vpop.trf.xlu0
        %v1994 = vpop.trf.xlu0
        %v1995 = vpop.trf.xlu0
        %v1996 = vpop.trf.xlu0
        %v1997 = vpop.trf.xlu0
        %v1998 = vpop.trf.xlu0
        %v1999 = vpop.trf.xlu0
        %v2000 = vpop.trf.xlu0
        %v2001 = vpop.trf.xlu0
        %v2002 = vpop.trf.xlu0
        %v2003 = vpop.trf.xlu0
        %v2004 = vpop.trf.xlu0
        %v2005 = vpop.trf.xlu0
        %v2006 = vpop.trf.xlu0
        %v2007 = vpop.trf.xlu0
        %v2008 = vpop.trf.xlu0
        %2009 = vxpose.xlu0.b32.start [1/16] %v1882, 128
        %2010 = vxpose.xlu0.b32.cont [2/16] %v1884, 128
        %2011 = vxpose.xlu0.b32.cont [3/16] %v1886, 128
        %2012 = vxpose.xlu0.b32.cont [4/16] %v1888, 128
        %2013 = vxpose.xlu0.b32.cont [5/16] %v1890, 128
        %2014 = vxpose.xlu0.b32.cont [6/16] %v1892, 128
        %2015 = vxpose.xlu0.b32.cont [7/16] %v1894, 128
        %2016 = vxpose.xlu0.b32.cont [8/16] %v1896, 128
        %2017 = vxpose.xlu0.b32.cont [9/16] 0.0, 128
        %2018 = vxpose.xlu0.b32.cont [10/16] 0.0, 128
        %2019 = vxpose.xlu0.b32.cont [11/16] 0.0, 128
        %2020 = vxpose.xlu0.b32.cont [12/16] 0.0, 128
        %2021 = vxpose.xlu0.b32.cont [13/16] 0.0, 128
        %2022 = vxpose.xlu0.b32.cont [14/16] 0.0, 128
        %2023 = vxpose.xlu0.b32.cont [15/16] 0.0, 128
        %2024 = vxpose.xlu0.b32.end [16/16] 0.0, 128
        %v2025 = vpop.trf.xlu0
        %v2026 = vpop.trf.xlu0
        %v2027 = vpop.trf.xlu0
        %v2028 = vpop.trf.xlu0
        %v2029 = vpop.trf.xlu0
        %v2030 = vpop.trf.xlu0
        %v2031 = vpop.trf.xlu0
        %v2032 = vpop.trf.xlu0
        %v2033 = vpop.trf.xlu0
        %v2034 = vpop.trf.xlu0
        %v2035 = vpop.trf.xlu0
        %v2036 = vpop.trf.xlu0
        %v2037 = vpop.trf.xlu0
        %v2038 = vpop.trf.xlu0
        %v2039 = vpop.trf.xlu0
        %v2040 = vpop.trf.xlu0
        %2041 = vxpose.xlu0.b32.start [1/16] %v1898, 128
        %2042 = vxpose.xlu0.b32.cont [2/16] %v1900, 128
        %2043 = vxpose.xlu0.b32.cont [3/16] %v1902, 128
        %2044 = vxpose.xlu0.b32.cont [4/16] %v1904, 128
        %2045 = vxpose.xlu0.b32.cont [5/16] %v1906, 128
        %2046 = vxpose.xlu0.b32.cont [6/16] %v1908, 128
        %2047 = vxpose.xlu0.b32.cont [7/16] %v1910, 128
        %2048 = vxpose.xlu0.b32.cont [8/16] %v1912, 128
        %2049 = vxpose.xlu0.b32.cont [9/16] 0.0, 128
        %2050 = vxpose.xlu0.b32.cont [10/16] 0.0, 128
        %2051 = vxpose.xlu0.b32.cont [11/16] 0.0, 128
        %2052 = vxpose.xlu0.b32.cont [12/16] 0.0, 128
        %2053 = vxpose.xlu0.b32.cont [13/16] 0.0, 128
        %2054 = vxpose.xlu0.b32.cont [14/16] 0.0, 128
        %2055 = vxpose.xlu0.b32.cont [15/16] 0.0, 128
        %2056 = vxpose.xlu0.b32.end [16/16] 0.0, 128
        %v2057 = vpop.trf.xlu0
        %v2058 = vpop.trf.xlu0
        %v2059 = vpop.trf.xlu0
        %v2060 = vpop.trf.xlu0
        %v2061 = vpop.trf.xlu0
        %v2062 = vpop.trf.xlu0
        %v2063 = vpop.trf.xlu0
        %v2064 = vpop.trf.xlu0
        %v2065 = vpop.trf.xlu0
        %v2066 = vpop.trf.xlu0
        %v2067 = vpop.trf.xlu0
        %v2068 = vpop.trf.xlu0
        %v2069 = vpop.trf.xlu0
        %v2070 = vpop.trf.xlu0
        %v2071 = vpop.trf.xlu0
        %v2072 = vpop.trf.xlu0
        %vm2073 = vcmask 523264
        %2074 = vst.msk [vmem:[%s258] sm:$0xff] %vm2073, %v1961
        %2075 = vst.msk [vmem:[%s258 + $0x8] sm:$0xff] %vm2073, %v1993
        %2076 = vst.msk [vmem:[%s258 + $0x10] sm:$0xff] %vm2073, %v2025
        %2077 = vst.msk [vmem:[%s258 + $0x18] sm:$0xff] %vm2073, %v2057
        %vm2078 = vcmask 64512
        %v2079 = vsel %vm2078, %v1850, 0.0
        %2080 = vadd.xlane.f32.xlu0 %v2079
        %v2081 = vpop.xlane.xlu0 %2080
        %v2082 = vsel %vm2078, %v1852, 0.0
        %2083 = vadd.xlane.f32.xlu0 %v2082
        %v2084 = vpop.xlane.xlu0 %2083
        %v2085 = vsel %vm2078, %v1854, 0.0
        %2086 = vadd.xlane.f32.xlu0 %v2085
        %v2087 = vpop.xlane.xlu0 %2086
        %v2088 = vsel %vm2078, %v1856, 0.0
        %2089 = vadd.xlane.f32.xlu0 %v2088
        %v2090 = vpop.xlane.xlu0 %2089
        %v2091 = vsel %vm2078, %v1858, 0.0
        %2092 = vadd.xlane.f32.xlu0 %v2091
        %v2093 = vpop.xlane.xlu0 %2092
        %v2094 = vsel %vm2078, %v1860, 0.0
        %2095 = vadd.xlane.f32.xlu0 %v2094
        %v2096 = vpop.xlane.xlu0 %2095
        %v2097 = vsel %vm2078, %v1862, 0.0
        %2098 = vadd.xlane.f32.xlu0 %v2097
        %v2099 = vpop.xlane.xlu0 %2098
        %v2100 = vsel %vm2078, %v1864, 0.0
        %2101 = vadd.xlane.f32.xlu0 %v2100
        %v2102 = vpop.xlane.xlu0 %2101
        %v2103 = vsel %vm2078, %v1866, 0.0
        %2104 = vadd.xlane.f32.xlu0 %v2103
        %v2105 = vpop.xlane.xlu0 %2104
        %v2106 = vsel %vm2078, %v1868, 0.0
        %2107 = vadd.xlane.f32.xlu0 %v2106
        %v2108 = vpop.xlane.xlu0 %2107
        %v2109 = vsel %vm2078, %v1870, 0.0
        %2110 = vadd.xlane.f32.xlu0 %v2109
        %v2111 = vpop.xlane.xlu0 %2110
        %v2112 = vsel %vm2078, %v1872, 0.0
        %2113 = vadd.xlane.f32.xlu0 %v2112
        %v2114 = vpop.xlane.xlu0 %2113
        %v2115 = vsel %vm2078, %v1874, 0.0
        %2116 = vadd.xlane.f32.xlu0 %v2115
        %v2117 = vpop.xlane.xlu0 %2116
        %v2118 = vsel %vm2078, %v1876, 0.0
        %2119 = vadd.xlane.f32.xlu0 %v2118
        %v2120 = vpop.xlane.xlu0 %2119
        %v2121 = vsel %vm2078, %v1878, 0.0
        %2122 = vadd.xlane.f32.xlu0 %v2121
        %v2123 = vpop.xlane.xlu0 %2122
        %v2124 = vsel %vm2078, %v1880, 0.0
        %2125 = vadd.xlane.f32.xlu0 %v2124
        %v2126 = vpop.xlane.xlu0 %2125
        %v2127 = vsel %vm2078, %v1882, 0.0
        %2128 = vadd.xlane.f32.xlu0 %v2127
        %v2129 = vpop.xlane.xlu0 %2128
        %v2130 = vsel %vm2078, %v1884, 0.0
        %2131 = vadd.xlane.f32.xlu0 %v2130
        %v2132 = vpop.xlane.xlu0 %2131
        %v2133 = vsel %vm2078, %v1886, 0.0
        %2134 = vadd.xlane.f32.xlu0 %v2133
        %v2135 = vpop.xlane.xlu0 %2134
        %v2136 = vsel %vm2078, %v1888, 0.0
        %2137 = vadd.xlane.f32.xlu0 %v2136
        %v2138 = vpop.xlane.xlu0 %2137
        %v2139 = vsel %vm2078, %v1890, 0.0
        %2140 = vadd.xlane.f32.xlu0 %v2139
        %v2141 = vpop.xlane.xlu0 %2140
        %v2142 = vsel %vm2078, %v1892, 0.0
        %2143 = vadd.xlane.f32.xlu0 %v2142
        %v2144 = vpop.xlane.xlu0 %2143
        %v2145 = vsel %vm2078, %v1894, 0.0
        %2146 = vadd.xlane.f32.xlu0 %v2145
        %v2147 = vpop.xlane.xlu0 %2146
        %v2148 = vsel %vm2078, %v1896, 0.0
        %2149 = vadd.xlane.f32.xlu0 %v2148
        %v2150 = vpop.xlane.xlu0 %2149
        %v2151 = vsel %vm2078, %v1898, 0.0
        %2152 = vadd.xlane.f32.xlu0 %v2151
        %v2153 = vpop.xlane.xlu0 %2152
        %v2154 = vsel %vm2078, %v1900, 0.0
        %2155 = vadd.xlane.f32.xlu0 %v2154
        %v2156 = vpop.xlane.xlu0 %2155
        %v2157 = vsel %vm2078, %v1902, 0.0
        %2158 = vadd.xlane.f32.xlu0 %v2157
        %v2159 = vpop.xlane.xlu0 %2158
        %v2160 = vsel %vm2078, %v1904, 0.0
        %2161 = vadd.xlane.f32.xlu0 %v2160
        %v2162 = vpop.xlane.xlu0 %2161
        %v2163 = vsel %vm2078, %v1906, 0.0
        %2164 = vadd.xlane.f32.xlu0 %v2163
        %v2165 = vpop.xlane.xlu0 %2164
        %v2166 = vsel %vm2078, %v1908, 0.0
        %2167 = vadd.xlane.f32.xlu0 %v2166
        %v2168 = vpop.xlane.xlu0 %2167
        %v2169 = vsel %vm2078, %v1910, 0.0
        %2170 = vadd.xlane.f32.xlu0 %v2169
        %v2171 = vpop.xlane.xlu0 %2170
        %v2172 = vsel %vm2078, %v1912, 0.0
        %2173 = vadd.xlane.f32.xlu0 %v2172
        %v2174 = vpop.xlane.xlu0 %2173
        %v2175 = vrcp.pop 8.0
        %v2176 = vmul.f32 %v2081, %v2175
        %v2177 = vmul.f32 %v2084, %v2175
        %v2178 = vmul.f32 %v2087, %v2175
        %v2179 = vmul.f32 %v2090, %v2175
        %v2180 = vmul.f32 %v2093, %v2175
        %v2181 = vmul.f32 %v2096, %v2175
        %v2182 = vmul.f32 %v2099, %v2175
        %v2183 = vmul.f32 %v2102, %v2175
        %v2184 = vmul.f32 %v2105, %v2175
        %v2185 = vmul.f32 %v2108, %v2175
        %v2186 = vmul.f32 %v2111, %v2175
        %v2187 = vmul.f32 %v2114, %v2175
        %v2188 = vmul.f32 %v2117, %v2175
        %v2189 = vmul.f32 %v2120, %v2175
        %v2190 = vmul.f32 %v2123, %v2175
        %v2191 = vmul.f32 %v2126, %v2175
        %v2192 = vmul.f32 %v2129, %v2175
        %v2193 = vmul.f32 %v2132, %v2175
        %v2194 = vmul.f32 %v2135, %v2175
        %v2195 = vmul.f32 %v2138, %v2175
        %v2196 = vmul.f32 %v2141, %v2175
        %v2197 = vmul.f32 %v2144, %v2175
        %v2198 = vmul.f32 %v2147, %v2175
        %v2199 = vmul.f32 %v2150, %v2175
        %v2200 = vmul.f32 %v2153, %v2175
        %v2201 = vmul.f32 %v2156, %v2175
        %v2202 = vmul.f32 %v2159, %v2175
        %v2203 = vmul.f32 %v2162, %v2175
        %v2204 = vmul.f32 %v2165, %v2175
        %v2205 = vmul.f32 %v2168, %v2175
        %v2206 = vmul.f32 %v2171, %v2175
        %v2207 = vmul.f32 %v2174, %v2175
        %vm2208 = vcmask 392512
        %v2209 = vsel %vm2208, %v1399, 0.0
        %v2210 = vsel %vm2208, %v1404, 0.0
        %v2211 = vadd.f32 %v2209, %v2210
        %v2212 = vsel %vm2208, %v1409, 0.0
        %v2213 = vadd.f32 %v2211, %v2212
        %v2214 = vsel %vm2208, %v1414, 0.0
        %v2215 = vadd.f32 %v2213, %v2214
        %v2216 = vsel %vm2208, %v1419, 0.0
        %v2217 = vadd.f32 %v2215, %v2216
        %v2218 = vsel %vm2208, %v1424, 0.0
        %v2219 = vadd.f32 %v2217, %v2218
        %v2220 = vsel %vm2208, %v1429, 0.0
        %v2221 = vadd.f32 %v2219, %v2220
        %v2222 = vsel %vm2208, %v1434, 0.0
        %v2223 = vadd.f32 %v2221, %v2222
        %v2224 = vrot.slane %v2223, 4
        %v2225 = vadd.f32 %v2223, %v2224
        %v2226 = vrot.slane %v2225, 2
        %v2227 = vadd.f32 %v2225, %v2226
        %v2228 = vrot.slane %v2227, 1
        %v2229 = vadd.f32 %v2227, %v2228
        %v2230 = vsel %vm2208, %v1439, 0.0
        %v2231 = vsel %vm2208, %v1444, 0.0
        %v2232 = vadd.f32 %v2230, %v2231
        %v2233 = vsel %vm2208, %v1449, 0.0
        %v2234 = vadd.f32 %v2232, %v2233
        %v2235 = vsel %vm2208, %v1454, 0.0
        %v2236 = vadd.f32 %v2234, %v2235
        %v2237 = vsel %vm2208, %v1459, 0.0
        %v2238 = vadd.f32 %v2236, %v2237
        %v2239 = vsel %vm2208, %v1464, 0.0
        %v2240 = vadd.f32 %v2238, %v2239
        %v2241 = vsel %vm2208, %v1469, 0.0
        %v2242 = vadd.f32 %v2240, %v2241
        %v2243 = vsel %vm2208, %v1474, 0.0
        %v2244 = vadd.f32 %v2242, %v2243
        %v2245 = vrot.slane %v2244, 4
        %v2246 = vadd.f32 %v2244, %v2245
        %v2247 = vrot.slane %v2246, 2
        %v2248 = vadd.f32 %v2246, %v2247
        %v2249 = vrot.slane %v2248, 1
        %v2250 = vadd.f32 %v2248, %v2249
        %v2251 = vsel %vm2208, %v1479, 0.0
        %v2252 = vsel %vm2208, %v1484, 0.0
        %v2253 = vadd.f32 %v2251, %v2252
        %v2254 = vsel %vm2208, %v1489, 0.0
        %v2255 = vadd.f32 %v2253, %v2254
        %v2256 = vsel %vm2208, %v1494, 0.0
        %v2257 = vadd.f32 %v2255, %v2256
        %v2258 = vsel %vm2208, %v1499, 0.0
        %v2259 = vadd.f32 %v2257, %v2258
        %v2260 = vsel %vm2208, %v1504, 0.0
        %v2261 = vadd.f32 %v2259, %v2260
        %v2262 = vsel %vm2208, %v1509, 0.0
        %v2263 = vadd.f32 %v2261, %v2262
        %v2264 = vsel %vm2208, %v1514, 0.0
        %v2265 = vadd.f32 %v2263, %v2264
        %v2266 = vrot.slane %v2265, 4
        %v2267 = vadd.f32 %v2265, %v2266
        %v2268 = vrot.slane %v2267, 2
        %v2269 = vadd.f32 %v2267, %v2268
        %v2270 = vrot.slane %v2269, 1
        %v2271 = vadd.f32 %v2269, %v2270
        %v2272 = vsel %vm2208, %v1519, 0.0
        %v2273 = vsel %vm2208, %v1524, 0.0
        %v2274 = vadd.f32 %v2272, %v2273
        %v2275 = vsel %vm2208, %v1529, 0.0
        %v2276 = vadd.f32 %v2274, %v2275
        %v2277 = vsel %vm2208, %v1534, 0.0
        %v2278 = vadd.f32 %v2276, %v2277
        %v2279 = vsel %vm2208, %v1539, 0.0
        %v2280 = vadd.f32 %v2278, %v2279
        %v2281 = vsel %vm2208, %v1544, 0.0
        %v2282 = vadd.f32 %v2280, %v2281
        %v2283 = vsel %vm2208, %v1549, 0.0
        %v2284 = vadd.f32 %v2282, %v2283
        %v2285 = vsel %vm2208, %v1554, 0.0
        %v2286 = vadd.f32 %v2284, %v2285
        %v2287 = vrot.slane %v2286, 4
        %v2288 = vadd.f32 %v2286, %v2287
        %v2289 = vrot.slane %v2288, 2
        %v2290 = vadd.f32 %v2288, %v2289
        %v2291 = vrot.slane %v2290, 1
        %v2292 = vadd.f32 %v2290, %v2291
        %v2293 = vmul.f32 %v1399, %v2176
        %v2294 = vmul.f32 %v1404, %v2177
        %v2295 = vmul.f32 %v1409, %v2178
        %v2296 = vmul.f32 %v1414, %v2179
        %v2297 = vmul.f32 %v1419, %v2180
        %v2298 = vmul.f32 %v1424, %v2181
        %v2299 = vmul.f32 %v1429, %v2182
        %v2300 = vmul.f32 %v1434, %v2183
        %v2301 = vmul.f32 %v1439, %v2184
        %v2302 = vmul.f32 %v1444, %v2185
        %v2303 = vmul.f32 %v1449, %v2186
        %v2304 = vmul.f32 %v1454, %v2187
        %v2305 = vmul.f32 %v1459, %v2188
        %v2306 = vmul.f32 %v1464, %v2189
        %v2307 = vmul.f32 %v1469, %v2190
        %v2308 = vmul.f32 %v1474, %v2191
        %v2309 = vmul.f32 %v1479, %v2192
        %v2310 = vmul.f32 %v1484, %v2193
        %v2311 = vmul.f32 %v1489, %v2194
        %v2312 = vmul.f32 %v1494, %v2195
        %v2313 = vmul.f32 %v1499, %v2196
        %v2314 = vmul.f32 %v1504, %v2197
        %v2315 = vmul.f32 %v1509, %v2198
        %v2316 = vmul.f32 %v1514, %v2199
        %v2317 = vmul.f32 %v1519, %v2200
        %v2318 = vmul.f32 %v1524, %v2201
        %v2319 = vmul.f32 %v1529, %v2202
        %v2320 = vmul.f32 %v1534, %v2203
        %v2321 = vmul.f32 %v1539, %v2204
        %v2322 = vmul.f32 %v1544, %v2205
        %v2323 = vmul.f32 %v1549, %v2206
        %v2324 = vmul.f32 %v1554, %v2207
        %vm2325 = vcmask 458112
        %v2326 = vsel %vm2325, %v2293, 0.0
        %v2327 = vsel %vm2325, %v2294, 0.0
        %v2328 = vadd.f32 %v2326, %v2327
        %v2329 = vsel %vm2325, %v2295, 0.0
        %v2330 = vadd.f32 %v2328, %v2329
        %v2331 = vsel %vm2325, %v2296, 0.0
        %v2332 = vadd.f32 %v2330, %v2331
        %v2333 = vsel %vm2325, %v2297, 0.0
        %v2334 = vadd.f32 %v2332, %v2333
        %v2335 = vsel %vm2325, %v2298, 0.0
        %v2336 = vadd.f32 %v2334, %v2335
        %v2337 = vsel %vm2325, %v2299, 0.0
        %v2338 = vadd.f32 %v2336, %v2337
        %v2339 = vsel %vm2325, %v2300, 0.0
        %v2340 = vadd.f32 %v2338, %v2339
        %v2341 = vrot.slane %v2340, 4
        %v2342 = vadd.f32 %v2340, %v2341
        %v2343 = vrot.slane %v2342, 2
        %v2344 = vadd.f32 %v2342, %v2343
        %v2345 = vrot.slane %v2344, 1
        %v2346 = vadd.f32 %v2344, %v2345
        %v2347 = vsel %vm2325, %v2301, 0.0
        %v2348 = vsel %vm2325, %v2302, 0.0
        %v2349 = vadd.f32 %v2347, %v2348
        %v2350 = vsel %vm2325, %v2303, 0.0
        %v2351 = vadd.f32 %v2349, %v2350
        %v2352 = vsel %vm2325, %v2304, 0.0
        %v2353 = vadd.f32 %v2351, %v2352
        %v2354 = vsel %vm2325, %v2305, 0.0
        %v2355 = vadd.f32 %v2353, %v2354
        %v2356 = vsel %vm2325, %v2306, 0.0
        %v2357 = vadd.f32 %v2355, %v2356
        %v2358 = vsel %vm2325, %v2307, 0.0
        %v2359 = vadd.f32 %v2357, %v2358
        %v2360 = vsel %vm2325, %v2308, 0.0
        %v2361 = vadd.f32 %v2359, %v2360
        %v2362 = vrot.slane %v2361, 4
        %v2363 = vadd.f32 %v2361, %v2362
        %v2364 = vrot.slane %v2363, 2
        %v2365 = vadd.f32 %v2363, %v2364
        %v2366 = vrot.slane %v2365, 1
        %v2367 = vadd.f32 %v2365, %v2366
        %v2368 = vsel %vm2325, %v2309, 0.0
        %v2369 = vsel %vm2325, %v2310, 0.0
        %v2370 = vadd.f32 %v2368, %v2369
        %v2371 = vsel %vm2325, %v2311, 0.0
        %v2372 = vadd.f32 %v2370, %v2371
        %v2373 = vsel %vm2325, %v2312, 0.0
        %v2374 = vadd.f32 %v2372, %v2373
        %v2375 = vsel %vm2325, %v2313, 0.0
        %v2376 = vadd.f32 %v2374, %v2375
        %v2377 = vsel %vm2325, %v2314, 0.0
        %v2378 = vadd.f32 %v2376, %v2377
        %v2379 = vsel %vm2325, %v2315, 0.0
        %v2380 = vadd.f32 %v2378, %v2379
        %v2381 = vsel %vm2325, %v2316, 0.0
        %v2382 = vadd.f32 %v2380, %v2381
        %v2383 = vrot.slane %v2382, 4
        %v2384 = vadd.f32 %v2382, %v2383
        %v2385 = vrot.slane %v2384, 2
        %v2386 = vadd.f32 %v2384, %v2385
        %v2387 = vrot.slane %v2386, 1
        %v2388 = vadd.f32 %v2386, %v2387
        %v2389 = vsel %vm2325, %v2317, 0.0
        %v2390 = vsel %vm2325, %v2318, 0.0
        %v2391 = vadd.f32 %v2389, %v2390
        %v2392 = vsel %vm2325, %v2319, 0.0
        %v2393 = vadd.f32 %v2391, %v2392
        %v2394 = vsel %vm2325, %v2320, 0.0
        %v2395 = vadd.f32 %v2393, %v2394
        %v2396 = vsel %vm2325, %v2321, 0.0
        %v2397 = vadd.f32 %v2395, %v2396
        %v2398 = vsel %vm2325, %v2322, 0.0
        %v2399 = vadd.f32 %v2397, %v2398
        %v2400 = vsel %vm2325, %v2323, 0.0
        %v2401 = vadd.f32 %v2399, %v2400
        %v2402 = vsel %vm2325, %v2324, 0.0
        %v2403 = vadd.f32 %v2401, %v2402
        %v2404 = vrot.slane %v2403, 4
        %v2405 = vadd.f32 %v2403, %v2404
        %v2406 = vrot.slane %v2405, 2
        %v2407 = vadd.f32 %v2405, %v2406
        %v2408 = vrot.slane %v2407, 1
        %v2409 = vadd.f32 %v2407, %v2408
        %2414 = vrot.lane.b32.xlu0 %v2346, 120
        %v2415 = vpop.permute.xlu0 %2414
        %2416 = vrot.lane.b32.xlu0 %v2367, 120
        %v2417 = vpop.permute.xlu0 %2416
        %2418 = vrot.lane.b32.xlu0 %v2388, 120
        %v2419 = vpop.permute.xlu0 %2418
        %2420 = vrot.lane.b32.xlu0 %v2409, 120
        %v2421 = vpop.permute.xlu0 %2420
        %v2426 = vadd.f32 %v2229, %v2415
        %v2427 = vadd.f32 %v2250, %v2417
        %v2428 = vadd.f32 %v2271, %v2419
        %v2429 = vadd.f32 %v2292, %v2421
        %v2430 = vmul.f32 %v2426, 0.015625
        %v2431 = vmul.f32 %v2427, 0.015625
        %v2432 = vmul.f32 %v2428, 0.015625
        %v2433 = vmul.f32 %v2429, 0.015625
        %v2434 = vld [vmem:[%s4] sm:$0x1]
        %v2436 = vlaneseq
        %v2437 = vshrl.u32 %v2436, 7
        %v2438 = vsub.s32 0, %v2437
        %v2439 = vrot.slane %v2434, %v2438
        %2440 = vrot.lane.b32.xlu0 %v2439, 40
        %v2441 = vpop.permute.xlu0 %2440
        %v2443 = vadd.f32 %v2430, %v2441
        %v2444 = vadd.f32 %v2431, %v2441
        %v2445 = vadd.f32 %v2432, %v2441
        %v2446 = vadd.f32 %v2433, %v2441
        %v2451 = vrot.slane %v2443, 7
        %v2452 = vrot.slane %v2444, 7
        %v2453 = vrot.slane %v2445, 7
        %v2454 = vrot.slane %v2446, 7
        %2455 = vrot.lane.b32.xlu0 %v2451, 88
        %v2456 = vpop.permute.xlu0 %2455
        %2457 = vrot.lane.b32.xlu0 %v2452, 88
        %v2458 = vpop.permute.xlu0 %2457
        %2459 = vrot.lane.b32.xlu0 %v2453, 88
        %v2460 = vpop.permute.xlu0 %2459
        %2461 = vrot.lane.b32.xlu0 %v2454, 88
        %v2462 = vpop.permute.xlu0 %2461
        %vm2467 = vcmask 1040384
        %v2468 = vsel %vm2467, %v1743, %v2456
        %v2469 = vsel %vm2467, %v1750, %v2458
        %v2470 = vsel %vm2467, %v1751, %v2460
        %v2471 = vsel %vm2467, %v1752, %v2462
        %vm2472 = vcmask 58368
        %v2473 = vsel %vm2472, %v2468, -inf
        %2474 = vmax.xlane.f32.xlu0 %v2473
        %v2475 = vpop.xlane.xlu0 %2474
        %v2476 = vsel %vm2472, %v2469, -inf
        %2477 = vmax.xlane.f32.xlu0 %v2476
        %v2478 = vpop.xlane.xlu0 %2477
        %v2479 = vsel %vm2472, %v2470, -inf
        %2480 = vmax.xlane.f32.xlu0 %v2479
        %v2481 = vpop.xlane.xlu0 %2480
        %v2482 = vsel %vm2472, %v2471, -inf
        %2483 = vmax.xlane.f32.xlu0 %v2482
        %v2484 = vpop.xlane.xlu0 %2483
        %v2485 = vsub.f32 %v2468, %v2475
        %v2486 = vsub.f32 %v2469, %v2478
        %v2487 = vsub.f32 %v2470, %v2481
        %v2488 = vsub.f32 %v2471, %v2484
        %v2489 = vmul.f32 %v2485, 1.442695
        %v2490 = vpow.pop %v2489
        %v2491 = vmul.f32 %v2486, 1.442695
        %v2492 = vpow.pop %v2491
        %v2493 = vmul.f32 %v2487, 1.442695
        %v2494 = vpow.pop %v2493
        %v2495 = vmul.f32 %v2488, 1.442695
        %v2496 = vpow.pop %v2495
        %v2497 = vsel %vm2472, %v2490, 0.0
        %2498 = vadd.xlane.f32.xlu0 %v2497
        %v2499 = vpop.xlane.xlu0 %2498
        %v2500 = vsel %vm2472, %v2492, 0.0
        %2501 = vadd.xlane.f32.xlu0 %v2500
        %v2502 = vpop.xlane.xlu0 %2501
        %v2503 = vsel %vm2472, %v2494, 0.0
        %2504 = vadd.xlane.f32.xlu0 %v2503
        %v2505 = vpop.xlane.xlu0 %2504
        %v2506 = vsel %vm2472, %v2496, 0.0
        %2507 = vadd.xlane.f32.xlu0 %v2506
        %v2508 = vpop.xlane.xlu0 %2507
        %v2509 = vrcp.pop %v2499
        %v2510 = vmul.f32 %v2490, %v2509
        %v2511 = vrcp.pop %v2502
        %v2512 = vmul.f32 %v2492, %v2511
        %v2513 = vrcp.pop %v2505
        %v2514 = vmul.f32 %v2494, %v2513
        %v2515 = vrcp.pop %v2508
        %v2516 = vmul.f32 %v2496, %v2515
        %2517 = vst.msk [vmem:[%s251] sm:$0x3] %vm2472, %v2510
        %2518 = vst.msk [vmem:[%s251 + $0x2] sm:$0x3] %vm2472, %v2512
        %2519 = vst.msk [vmem:[%s251 + $0x4] sm:$0x3] %vm2472, %v2514
        %2520 = vst.msk [vmem:[%s251 + $0x6] sm:$0x3] %vm2472, %v2516
        %s2521 = sand.u32 %s142, 1
        %s2522 = scalar_lea.sflag [#allocation3], %s2521
        %s2523 = sand.u32 %s142, 1
        %s2524 = smul.addr %s2523, 8
        %s2525 = scalar_lea.vmem [#allocation2], %s2524
        %s2526 = sand.u32 %s168, 1
        %s2527 = scalar_lea.sflag [#allocation5], %s2526
        %s2528 = sand.u32 %s168, 1
        %s2529 = smul.addr %s2528, 32
        %s2530 = scalar_lea.vmem [#allocation4], %s2529
        // Predicated region
        $region41: #{tpu_custom_call.1} parent=39 // pred_check
          %p2531 = pneg %p152
        $region42: #{tpu_custom_call.1} parent=39 // pred_check_branch
          %2533 = sbr.rel (%p2531) target = $region44
        $region43: #{tpu_custom_call.1} parent=39 // pred_region
          %s2534 = smul.u32 4, %s24
          %s2536 = ssub.s32 128, 128
          %2537 = vsyncadd %s2522, %s2536
          %s2538 = smul.addr %s2534, 32
          %s2539 = scalar_lea.hbm %s5, %s2538
          %s2540 = sshll.u32 %s2525, 4
          %s2541 = int_to_ptr.vmem [resolvable:$true] %s2540
          %2546 = dma.vmem_to_hbm [thread:$0]  %s2541, 128, %s2539, %s2522, 32, 32, 2
        $region44: #{tpu_custom_call.1} parent=39 // pred_fallthru
          _
        // Predicated region
        $region45: #{tpu_custom_call.1} parent=39 // pred_check
          %p2547 = pneg %p178
        $region46: #{tpu_custom_call.1} parent=39 // pred_check_branch
          %2549 = sbr.rel (%p2547) target = $region48
        $region47: #{tpu_custom_call.1} parent=39 // pred_region
          %s2550 = smul.u32 4, %s24
          %s2552 = ssub.s32 512, 512
          %2553 = vsyncadd %s2527, %s2552
          %s2554 = smul.addr %s2550, 128
          %s2555 = scalar_lea.hbm %s6, %s2554
          %s2556 = sshll.u32 %s2530, 4
          %s2557 = int_to_ptr.vmem [resolvable:$true] %s2556
          %2562 = dma.vmem_to_hbm [thread:$0]  %s2557, 512, %s2555, %s2527, 128, 128, 8
        $region48: #{tpu_custom_call.1} parent=39 // pred_fallthru
          _
      $region40: #{tpu_custom_call.1} parent=5 // pred_fallthru
        _
      %p2563 = scmp.le.s32.totalorder 2, %s19
      // Predicated region
      $region49: #{tpu_custom_call.1} parent=5 // pred_check
        %p2564 = pneg %p2563
      $region50: #{tpu_custom_call.1} parent=5 // pred_check_branch
        %2566 = sbr.rel (%p2564) target = $region52
      $region51: #{tpu_custom_call.1} parent=5 // pred_region
        %s2567 = ssub.s32 %s19, 2
        // Predicated region
        $region53: #{tpu_custom_call.1} parent=51 // pred_check
          %p2568 = pneg %p158
        $region54: #{tpu_custom_call.1} parent=51 // pred_check_branch
          %2570 = sbr.rel (%p2568) target = $region56
        $region55: #{tpu_custom_call.1} parent=51 // pred_region
          %s2571 = sand.u32 %s143, 1
          %s2572 = scalar_lea.sflag [#allocation3], %s2571
          %s2573 = sand.u32 %s143, 1
          %s2574 = smul.addr %s2573, 8
          %s2575 = scalar_lea.vmem [#allocation2], %s2574
          %2576 = dma.done %s2572, 128
        $region56: #{tpu_custom_call.1} parent=51 // pred_fallthru
          _
        // Predicated region
        $region57: #{tpu_custom_call.1} parent=51 // pred_check
          %p2577 = pneg %p184
        $region58: #{tpu_custom_call.1} parent=51 // pred_check_branch
          %2579 = sbr.rel (%p2577) target = $region60
        $region59: #{tpu_custom_call.1} parent=51 // pred_region
          %s2580 = sand.u32 %s169, 1
          %s2581 = scalar_lea.sflag [#allocation5], %s2580
          %s2582 = sand.u32 %s169, 1
          %s2583 = smul.addr %s2582, 32
          %s2584 = scalar_lea.vmem [#allocation4], %s2583
          %2585 = dma.done %s2581, 512
        $region60: #{tpu_custom_call.1} parent=51 // pred_fallthru
          _
      $region52: #{tpu_custom_call.1} parent=5 // pred_fallthru
        _
    $region6: #{tpu_custom_call.1} parent=1 // loop_footer
      %s23 = sadd.s32 1, %s19
    $region7: #{tpu_custom_call.1} parent=1 // loop_footer_branch
      %18 = sbr.rel target = $region3
    $region8: #{tpu_custom_call.1} parent=1 // loop_exit
      _
    %2586 = vsyncpa [#allocation3], 1
    %s2587 = scalar_lea.sflag [#allocation3], 1
    %2588 = vsyncpa %s2587, 1
    %2589 = vsyncpa [#allocation5], 1
    %s2590 = scalar_lea.sflag [#allocation5], 1
    %2591 = vsyncpa %s2590, 1

</llo_original>
